<compile_context>
chip_gen: v7x
topology: tpu7x:2x2x1
jax: 0.10.0
libtpu: 0.0.40
codegen_flags: <defaults>
</compile_context>

<pallas_src>
import jax
import jax.numpy as jnp
from jax.experimental import pallas as pl
from jax.experimental.pallas import tpu as pltpu

_LANE = 128
_SUBLANE = 8


def _round_up(n, m):
    return ((n + m - 1) // m) * m


# ----------------------------------------------------------------------------
# Parameter init (PyTorch nn.Linear layout: weight (out, in), bias (out,))
# ----------------------------------------------------------------------------
def init_params(key, sizes):
    params = []
    for (fan_in, fan_out) in sizes:
        key, kw, kb = jax.random.split(key, 3)
        bound = 1.0 / jnp.sqrt(float(fan_in))
        w = jax.random.uniform(kw, (fan_out, fan_in), jnp.float32, -bound, bound)
        b = jax.random.uniform(kb, (fan_out,), jnp.float32, -bound, bound)
        params.append((w, b))
    return params


# ----------------------------------------------------------------------------
# One-time packing: transpose weights to (Fin, Fout), zero-pad feature dims to
# 128 lanes, and STACK everything into a single weight slab + single bias slab.
# ----------------------------------------------------------------------------
def pack_params(params, weight_dtype=jnp.float32):
    n = len(params)
    # Common padded output width (all hidden/output fan-outs padded up to it).
    wpad = max(_round_up(w.shape[0], _LANE) for (w, _) in params)

    # Per-layer row counts inside the weight slab (sublane-aligned offsets).
    fin0 = params[0][0].shape[1]
    slab_rows = [_round_up(fin0, _SUBLANE)] + [wpad] * (n - 1)
    row_offsets = [0]
    for r in slab_rows[:-1]:
        row_offsets.append(row_offsets[-1] + r)
    total_rows = row_offsets[-1] + slab_rows[-1]

    w_slab = jnp.zeros((total_rows, wpad), weight_dtype)
    b_slab = jnp.zeros((n, wpad), weight_dtype)
    for i, (w, b) in enumerate(params):
        fout, fin = w.shape
        w_slab = w_slab.at[row_offsets[i]:row_offsets[i] + fin, :fout].set(
            w.T.astype(weight_dtype))
        b_slab = b_slab.at[i, :fout].set(b.astype(weight_dtype))

    meta = dict(
        n_layers=n,
        wpad=wpad,
        fin0=fin0,
        row_offsets=tuple(row_offsets),
        # Rows actually consumed by each layer's matmul.
        slice_rows=(fin0,) + (wpad,) * (n - 1),
    )
    return w_slab, b_slab, meta


# ----------------------------------------------------------------------------
# Kernel: whole MLP on one activation tile; weights carved from the slab with
# static slices.  Intermediates never leave vregs/VMEM.
# ----------------------------------------------------------------------------
def _make_mlp_kernel(row_offsets, slice_rows, n_layers):
    def kernel(x_ref, w_ref, b_ref, o_ref):
        h = x_ref[...]
        b_all = b_ref[...]
        for i in range(n_layers):
            if i > 0:
                # ReLU fused into the consuming layer (matches Model.forward).
                h = jnp.maximum(h, 0.0)
            off = row_offsets[i]
            w = w_ref[off:off + slice_rows[i], :]
            h = jnp.dot(
                h, w,
                preferred_element_type=jnp.float32,
                precision=jax.lax.Precision.HIGHEST,
            ) + b_all[i]
        o_ref[...] = h.astype(o_ref.dtype)

    return kernel


# ----------------------------------------------------------------------------
# Wrapper.  Returns the lane-dense padded output (B, wpad); pad columns are
# exactly zero.  batch_tile=None -> single fused block (small B); otherwise a
# parallel grid over batch with VMEM-resident weights (constant index_map).
# ----------------------------------------------------------------------------
def mlp_forward(x, w_slab, b_slab, meta, *, batch_tile=None):
    n = meta["n_layers"]
    wpad = meta["wpad"]
    B, fin0 = x.shape
    assert fin0 == meta["fin0"]

    kernel = _make_mlp_kernel(meta["row_offsets"], meta["slice_rows"], n)
    out_shape = jax.ShapeDtypeStruct((B, wpad), x.dtype)

    if batch_tile is None or B <= batch_tile:
        # Whole working set (~100 KB) as full-array VMEM blocks; no grid.
        return pl.pallas_call(
            kernel,
            out_shape=out_shape,
            in_specs=[pl.BlockSpec(memory_space=pltpu.MemorySpace.VMEM)] * 3,
            out_specs=pl.BlockSpec(memory_space=pltpu.MemorySpace.VMEM),
        )(x, w_slab, b_slab)

    assert B % batch_tile == 0, "batch must be a multiple of batch_tile"
    grid = (B // batch_tile,)
    return pl.pallas_call(
        kernel,
        out_shape=out_shape,
        grid=grid,
        in_specs=[
            pl.BlockSpec((batch_tile, fin0), lambda i: (i, 0)),
            # Constant block index -> weight/bias slabs stay VMEM-resident
            # across grid steps (no re-DMA per tile).
            pl.BlockSpec(w_slab.shape, lambda i: (0, 0)),
            pl.BlockSpec(b_slab.shape, lambda i: (0, 0)),
        ],
        out_specs=pl.BlockSpec((batch_tile, wpad), lambda i: (i, 0)),
        compiler_params=pltpu.CompilerParams(
            dimension_semantics=("parallel",)),
    )(x, w_slab, b_slab)


if __name__ == "__main__":
    key = jax.random.PRNGKey(0)

    # MLP matching the PyTorch module: 32 -> 64 -> 64 -> 16
    sizes = [(32, 64), (64, 64), (64, 16)]
    batch = 8
    out_features = sizes[-1][1]

    key, kx, kp = jax.random.split(key, 3)
    x = jax.random.normal(kx, (batch, sizes[0][0]), jnp.float32)
    params = init_params(kp, sizes)               # PyTorch layout (out, in)
    w_slab, b_slab, meta = pack_params(params)    # one-time transpose/pad/stack

    # Pure-JAX reference of the same semantics (exact f32 matmuls).
    def ref_forward(xx):
        r = xx
        for idx, (w, b) in enumerate(params):
            inp = jnp.maximum(r, 0.0) if idx > 0 else r
            r = jnp.dot(inp, w.T, precision=jax.lax.Precision.HIGHEST) + b
        return r

    # --- Path 1: small batch, single fused VMEM block (no grid) -------------
    out = jax.block_until_ready(mlp_forward(x, w_slab, b_slab, meta))
    ref = ref_forward(x)
    assert out.shape == (batch, meta["wpad"])
    assert jnp.allclose(out[:, :out_features], ref, atol=1e-5, rtol=1e-5)
    assert bool(jnp.all(out[:, out_features:] == 0.0))   # pad lanes stay zero

    # --- Path 2: larger batch, parallel grid over batch (v7x: both TCs) -----
    big_b = 256
    key, kb = jax.random.split(key)
    xb = jax.random.normal(kb, (big_b, sizes[0][0]), jnp.float32)
    out_b = jax.block_until_ready(
        mlp_forward(xb, w_slab, b_slab, meta, batch_tile=128))
    ref_b = ref_forward(xb)
    assert out_b.shape == (big_b, meta["wpad"])
    assert jnp.allclose(out_b[:, :out_features], ref_b, atol=1e-5, rtol=1e-5)

    print("KERNEL_OK")
</pallas_src>

<mosaic_0001>
module attributes {stable_mosaic.version = 11 : i64} {
  func.func @kernel(%arg0: memref<8x32xf32, #tpu.memory_space<vmem>>, %arg1: memref<288x128xf32, #tpu.memory_space<vmem>>, %arg2: memref<3x128xf32, #tpu.memory_space<vmem>>, %arg3: memref<8x128xf32, #tpu.memory_space<vmem>>) attributes {dimension_semantics = [], scalar_prefetch = 0 : i64, scratch_operands = 0 : i64, tpu.core_type = #tpu.core_type<tc>} {
    %c0 = arith.constant 0 : index
    %c0_0 = arith.constant 0 : index
    %0 = vector.load %arg0[%c0, %c0_0] : memref<8x32xf32, #tpu.memory_space<vmem>>, vector<8x32xf32>
    %c0_1 = arith.constant 0 : index
    %c0_2 = arith.constant 0 : index
    %1 = vector.load %arg2[%c0_1, %c0_2] : memref<3x128xf32, #tpu.memory_space<vmem>>, vector<3x128xf32>
    %c0_3 = arith.constant 0 : index
    %c0_4 = arith.constant 0 : index
    %2 = vector.load %arg1[%c0_3, %c0_4] : memref<288x128xf32, #tpu.memory_space<vmem>>, vector<32x128xf32>
    %cst = arith.constant dense<0.000000e+00> : vector<8x128xf32>
    %3 = tpu.matmul %0, %2, %cst {dimension_numbers = #tpu.dot_dimension_numbers<[1], [0], [0], [1], [0, 0, 1, 1], [], []>, precision = #tpu.contract_precision<fp32>} : vector<8x32xf32>, vector<32x128xf32>, vector<8x128xf32> -> vector<8x128xf32>
    %4 = vector.extract_strided_slice %1 {offsets = [0, 0], sizes = [1, 128], strides = [1, 1]} : vector<3x128xf32> to vector<1x128xf32>
    %5 = vector.shape_cast %4 : vector<1x128xf32> to vector<128xf32>
    %6 = vector.shape_cast %5 : vector<128xf32> to vector<1x128xf32>
    %7 = vector.broadcast %6 : vector<1x128xf32> to vector<8x128xf32>
    %8 = arith.addf %3, %7 : vector<8x128xf32>
    %cst_5 = arith.constant 0.000000e+00 : f32
    %9 = vector.broadcast %cst_5 : f32 to vector<8x128xf32>
    %10 = arith.maximumf %8, %9 : vector<8x128xf32>
    %c32 = arith.constant 32 : index
    %c0_6 = arith.constant 0 : index
    %11 = vector.load %arg1[%c32, %c0_6] : memref<288x128xf32, #tpu.memory_space<vmem>>, vector<128x128xf32>
    %cst_7 = arith.constant dense<0.000000e+00> : vector<8x128xf32>
    %12 = tpu.matmul %10, %11, %cst_7 {dimension_numbers = #tpu.dot_dimension_numbers<[1], [0], [0], [1], [0, 0, 1, 1], [], []>, precision = #tpu.contract_precision<fp32>} : vector<8x128xf32>, vector<128x128xf32>, vector<8x128xf32> -> vector<8x128xf32>
    %13 = vector.extract_strided_slice %1 {offsets = [1, 0], sizes = [1, 128], strides = [1, 1]} : vector<3x128xf32> to vector<1x128xf32>
    %14 = vector.shape_cast %13 : vector<1x128xf32> to vector<128xf32>
    %15 = vector.shape_cast %14 : vector<128xf32> to vector<1x128xf32>
    %16 = vector.broadcast %15 : vector<1x128xf32> to vector<8x128xf32>
    %17 = arith.addf %12, %16 : vector<8x128xf32>
    %cst_8 = arith.constant 0.000000e+00 : f32
    %18 = vector.broadcast %cst_8 : f32 to vector<8x128xf32>
    %19 = arith.maximumf %17, %18 : vector<8x128xf32>
    %c160 = arith.constant 160 : index
    %c0_9 = arith.constant 0 : index
    %20 = vector.load %arg1[%c160, %c0_9] : memref<288x128xf32, #tpu.memory_space<vmem>>, vector<128x128xf32>
    %cst_10 = arith.constant dense<0.000000e+00> : vector<8x128xf32>
    %21 = tpu.matmul %19, %20, %cst_10 {dimension_numbers = #tpu.dot_dimension_numbers<[1], [0], [0], [1], [0, 0, 1, 1], [], []>, precision = #tpu.contract_precision<fp32>} : vector<8x128xf32>, vector<128x128xf32>, vector<8x128xf32> -> vector<8x128xf32>
    %22 = vector.extract_strided_slice %1 {offsets = [2, 0], sizes = [1, 128], strides = [1, 1]} : vector<3x128xf32> to vector<1x128xf32>
    %23 = vector.shape_cast %22 : vector<1x128xf32> to vector<128xf32>
    %24 = vector.shape_cast %23 : vector<128xf32> to vector<1x128xf32>
    %25 = vector.broadcast %24 : vector<1x128xf32> to vector<8x128xf32>
    %26 = arith.addf %21, %25 : vector<8x128xf32>
    %c0_11 = arith.constant 0 : index
    %c0_12 = arith.constant 0 : index
    %27 = vector.load %arg3[%c0_11, %c0_12] : memref<8x128xf32, #tpu.memory_space<vmem>>, vector<8x128xf32>
    tpu.vector_store %arg3[%c0_11, %c0_12], %26 {strides = array<i32>} : memref<8x128xf32, #tpu.memory_space<vmem>>, vector<8x128xf32>,
    return
  }
}

</mosaic_0001>

<llo_original>
// kernel: tpu_custom_call.1
$region0: #{tpu_custom_call.1}
  #allocation0 [shape = 'u32[]', space=smem, size = 0x4, offset = 0x4, fixed_abs, tag = 'smem constant byte address 0x4 - core index']
  #allocation1 [shape = 'u32[144,128]{1,0:T(1,128)}', space=vmem, size = 0x12000, scoped, tag = 'internal scratch']
  %s0 = inlined_call_operand.hbm [shape: f32[8,32], index: 0, kind: input, shape index: {}]
  %s1 = inlined_call_operand.hbm [shape: f32[288,128], index: 1, kind: input, shape index: {}]
  %s2 = inlined_call_operand.vmem [shape: f32[3,128], index: 2, kind: input, shape index: {}]
  %s3 = inlined_call_operand.hbm [shape: f32[8,128], index: 3, kind: output, shape index: {}]
  %s4 = sld [smem:[#allocation0]]
  $region30: #{tpu_custom_call.1} parent=0
    _
  %s6 = ssub.s32 1, %s4
  %s7 = scalar_select 0, %s6, %s4
  $region1: #{tpu_custom_call.1} parent=0
    #allocation2 [shape = 'u8[4096]{0}', space=vmem, size = 0x1000, scoped, tag = 'input window, operand 0, single buffered']
    #allocation3 [shape = 's32[1]{0}', space=sflag, size = 0x4, scoped, tag = 'scoped memory for tpu_custom_call.1']
    #allocation4 [shape = 's32[1]{0}', space=sflag, size = 0x4, scoped, tag = 'scoped memory for tpu_custom_call.1']
    #allocation5 [shape = 'u8[147456]{0}', space=vmem, size = 0x24000, scoped, tag = 'input window, operand 1, single buffered']
    #allocation6 [shape = 's32[1]{0}', space=sflag, size = 0x4, scoped, tag = 'scoped memory for tpu_custom_call.1']
    #allocation7 [shape = 'u8[4096]{0}', space=vmem, size = 0x1000, scoped, tag = 'output window, operand 0, single buffered']
    %8 = vsyncpa [#allocation3], 0
    %9 = vsyncpa [#allocation6], 0
    %10 = vsyncpa [#allocation4], 0
    // Predicated region
    $region2: #{tpu_custom_call.1} parent=1 // pred_check
      _
    $region3: #{tpu_custom_call.1} parent=1 // pred_check_branch
      %12 = sbr.rel (0) target = $region5
    $region4: #{tpu_custom_call.1} parent=1 // pred_region
      %s14 = ssub.s32 128, 128
      %15 = vsyncadd [#allocation3], %s14
      %s17 = sshll.u32 [#allocation2], 4
      %s18 = int_to_ptr.vmem [resolvable:$true] %s17
      %20 = dma.hbm_to_vmem [thread:$0]  %s0, 128, %s18, [#allocation3]
    $region5: #{tpu_custom_call.1} parent=1 // pred_fallthru
      _
    // Predicated region
    $region6: #{tpu_custom_call.1} parent=1 // pred_check
      _
    $region7: #{tpu_custom_call.1} parent=1 // pred_check_branch
      %22 = sbr.rel (0) target = $region9
    $region8: #{tpu_custom_call.1} parent=1 // pred_region
      %s24 = ssub.s32 4608, 4608
      %25 = vsyncadd [#allocation6], %s24
      %s26 = sshll.u32 [#allocation5], 4
      %s27 = int_to_ptr.vmem [resolvable:$true] %s26
      %32 = dma.hbm_to_vmem [thread:$0]  %s1, 4608, %s27, [#allocation6], 128, 128, 8
    $region9: #{tpu_custom_call.1} parent=1 // pred_fallthru
      _
    // Predicated region
    $region10: #{tpu_custom_call.1} parent=1 // pred_check
      _
    $region11: #{tpu_custom_call.1} parent=1 // pred_check_branch
      %34 = sbr.rel (0) target = $region13
    $region12: #{tpu_custom_call.1} parent=1 // pred_region
      _
    $region13: #{tpu_custom_call.1} parent=1 // pred_fallthru
      _
    // Predicated region
    $region14: #{tpu_custom_call.1} parent=1 // pred_check
      _
    $region15: #{tpu_custom_call.1} parent=1 // pred_check_branch
      %36 = sbr.rel (0) target = $region17
    $region16: #{tpu_custom_call.1} parent=1 // pred_region
      %37 = dma.done [#allocation3], 128
    $region17: #{tpu_custom_call.1} parent=1 // pred_fallthru
      _
    // Predicated region
    $region18: #{tpu_custom_call.1} parent=1 // pred_check
      _
    $region19: #{tpu_custom_call.1} parent=1 // pred_check_branch
      %39 = sbr.rel (0) target = $region21
    $region20: #{tpu_custom_call.1} parent=1 // pred_region
      %40 = dma.done [#allocation6], 4608
    $region21: #{tpu_custom_call.1} parent=1 // pred_fallthru
      _
    %v41 = vld [vmem:[#allocation2] sm:$0xff]
    %v42 = vld [vmem:[%s2] sm:$0x7]
    %v43 = vld [vmem:[#allocation5] sm:$0xff]
    %v44 = vld [vmem:[#allocation5 + $0x8] sm:$0xff]
    %v45 = vld [vmem:[#allocation5 + $0x10] sm:$0xff]
    %v46 = vld [vmem:[#allocation5 + $0x18] sm:$0xff]
    %v47 = vlaneseq
    %v48 = vshrl.u32 %v47, 7
    %v49 = vsub.s32 0, %v48
    %v50 = vrot.slane %v42, %v49
    %vm51 = vcmask 261120
    %v53 = vsel %vm51, %v41, 0
    %55 = vmatprep.subr.mxu0 0.0
    %v56 = vand.u32 %v43, 4294901760
    %57 = vmatpush1.msra.mxu0 %v56
    %58 = vmatprep.subr.mxu0 0.0
    %v59 = vand.u32 %v44, 4294901760
    %60 = vmatpush1.msra.mxu0 %v59
    %61 = vmatprep.subr.mxu0 0.0
    %v62 = vand.u32 %v45, 4294901760
    %63 = vmatpush1.msra.mxu0 %v62
    %64 = vmatprep.subr.mxu0 0.0
    %v65 = vand.u32 %v46, 4294901760
    %66 = vmatpush1.msra.mxu0 %v65
    %67 = vmatprep.subr.mxu0 0.0
    %68 = vmatpush1.msra.mxu0 0.0
    %69 = vmatprep.subr.mxu0 0.0
    %70 = vmatpush1.msra.mxu0 0.0
    %71 = vmatprep.subr.mxu0 0.0
    %72 = vmatpush1.msra.mxu0 0.0
    %73 = vmatprep.subr.mxu0 0.0
    %74 = vmatpush1.msra.mxu0 0.0
    %75 = vmatprep.subr.mxu0 0.0
    %76 = vmatpush1.msra.mxu0 0.0
    %77 = vmatprep.subr.mxu0 0.0
    %78 = vmatpush1.msra.mxu0 0.0
    %79 = vmatprep.subr.mxu0 0.0
    %80 = vmatpush1.msra.mxu0 0.0
    %81 = vmatprep.subr.mxu0 0.0
    %82 = vmatpush1.msra.mxu0 0.0
    %83 = vmatprep.subr.mxu0 0.0
    %84 = vmatpush1.msra.mxu0 0.0
    %85 = vmatprep.subr.mxu0 0.0
    %86 = vmatpush1.msra.mxu0 0.0
    %87 = vmatprep.subr.mxu0 0.0
    %88 = vmatpush1.msra.mxu0 0.0
    %89 = vmatprep.subr.mxu0 0.0
    %90 = vmatpush1.msra.mxu0 0.0
    %91 = vmatprep.subr.mxu0 0.0
    %92 = vmatpush1.msra.mxu0 0.0
    %93 = vmatprep.subr.mxu0 0.0
    %94 = vmatpush1.msra.mxu0 0.0
    %95 = vmatprep.subr.mxu0 0.0
    %96 = vmatpush1.msra.mxu0 0.0
    %97 = vmatprep.subr.mxu0 0.0
    %98 = vmatpush1.msra.mxu0 0.0
    %99 = vmatprep.subr.mxu0 0.0
    %100 = vmatpush1.msra.mxu0 0.0
    %101 = vmatprep.subr.mxu0 0.0
    %102 = vmatpush1.msra.mxu0 0.0
    %103 = vmatprep.subr.mxu0 0.0
    %104 = vmatpush1.msra.mxu0 0.0
    %105 = vmatprep.subr.mxu0 0.0
    %106 = vmatpush1.msra.mxu0 0.0
    %107 = vmatprep.subr.mxu0 0.0
    %108 = vmatpush1.msra.mxu0 0.0
    %109 = vmatprep.subr.mxu0 0.0
    %110 = vmatpush1.msra.mxu0 0.0
    %111 = vmatprep.subr.mxu0 0.0
    %112 = vmatpush1.msra.mxu0 0.0
    %113 = vmatprep.subr.mxu0 0.0
    %114 = vmatpush1.msra.mxu0 0.0
    %115 = vmatprep.subr.mxu0 0.0
    %116 = vmatpush1.msra.mxu0 0.0
    %117 = vmatprep.subr.mxu0 0.0
    %118 = vmatpush1.msra.mxu0 0.0
    %119 = vmatprep.subr.mxu0 0.0
    %120 = vmatpush1.msra.mxu0 0.0
    %121 = vmatprep.subr.mxu0 0.0
    %122 = vmatpush1.msra.mxu0 0.0
    %123 = vmatprep.mubr.f32.mxu0 0.0
    %v124 = vand.u32 %v53, 4294901760
    %v125 = vsub.f32 %v53, %v124
    %v126 = vand.u32 %v125, 4294901760
    %v127 = vsub.f32 %v125, %v126
    %v128 = vand.u32 %v127, 4294901760
    %129 = vmatmul.mubr.f32.gmra.mrb[0].mxu0 %v128
    %v130 = vpop.f32.mrb[0].mxu0
    %v131 = vadd.f32 %v50, %v130
    %v132 = vpop.f32.mrb[0].mxu0
    %133 = vdwg.mxu0
    %134 = vmatprep.subr.mxu0 0.0
    %v135 = vand.u32 %v43, 4294901760
    %v136 = vsub.f32 %v43, %v135
    %v137 = vand.u32 %v136, 4294901760
    %v138 = vsub.f32 %v136, %v137
    %v139 = vand.u32 %v138, 4294901760
    %140 = vmatpush1.msra.mxu0 %v139
    %141 = vmatprep.subr.mxu0 0.0
    %v142 = vand.u32 %v44, 4294901760
    %v143 = vsub.f32 %v44, %v142
    %v144 = vand.u32 %v143, 4294901760
    %v145 = vsub.f32 %v143, %v144
    %v146 = vand.u32 %v145, 4294901760
    %147 = vmatpush1.msra.mxu0 %v146
    %148 = vmatprep.subr.mxu0 0.0
    %v149 = vand.u32 %v45, 4294901760
    %v150 = vsub.f32 %v45, %v149
    %v151 = vand.u32 %v150, 4294901760
    %v152 = vsub.f32 %v150, %v151
    %v153 = vand.u32 %v152, 4294901760
    %154 = vmatpush1.msra.mxu0 %v153
    %155 = vmatprep.subr.mxu0 0.0
    %v156 = vand.u32 %v46, 4294901760
    %v157 = vsub.f32 %v46, %v156
    %v158 = vand.u32 %v157, 4294901760
    %v159 = vsub.f32 %v157, %v158
    %v160 = vand.u32 %v159, 4294901760
    %161 = vmatpush1.msra.mxu0 %v160
    %162 = vmatprep.subr.mxu0 0.0
    %163 = vmatpush1.msra.mxu0 0.0
    %164 = vmatprep.subr.mxu0 0.0
    %165 = vmatpush1.msra.mxu0 0.0
    %166 = vmatprep.subr.mxu0 0.0
    %167 = vmatpush1.msra.mxu0 0.0
    %168 = vmatprep.subr.mxu0 0.0
    %169 = vmatpush1.msra.mxu0 0.0
    %170 = vmatprep.subr.mxu0 0.0
    %171 = vmatpush1.msra.mxu0 0.0
    %172 = vmatprep.subr.mxu0 0.0
    %173 = vmatpush1.msra.mxu0 0.0
    %174 = vmatprep.subr.mxu0 0.0
    %175 = vmatpush1.msra.mxu0 0.0
    %176 = vmatprep.subr.mxu0 0.0
    %177 = vmatpush1.msra.mxu0 0.0
    %178 = vmatprep.subr.mxu0 0.0
    %179 = vmatpush1.msra.mxu0 0.0
    %180 = vmatprep.subr.mxu0 0.0
    %181 = vmatpush1.msra.mxu0 0.0
    %182 = vmatprep.subr.mxu0 0.0
    %183 = vmatpush1.msra.mxu0 0.0
    %184 = vmatprep.subr.mxu0 0.0
    %185 = vmatpush1.msra.mxu0 0.0
    %186 = vmatprep.subr.mxu0 0.0
    %187 = vmatpush1.msra.mxu0 0.0
    %188 = vmatprep.subr.mxu0 0.0
    %189 = vmatpush1.msra.mxu0 0.0
    %190 = vmatprep.subr.mxu0 0.0
    %191 = vmatpush1.msra.mxu0 0.0
    %192 = vmatprep.subr.mxu0 0.0
    %193 = vmatpush1.msra.mxu0 0.0
    %194 = vmatprep.subr.mxu0 0.0
    %195 = vmatpush1.msra.mxu0 0.0
    %196 = vmatprep.subr.mxu0 0.0
    %197 = vmatpush1.msra.mxu0 0.0
    %198 = vmatprep.subr.mxu0 0.0
    %199 = vmatpush1.msra.mxu0 0.0
    %200 = vmatprep.subr.mxu0 0.0
    %201 = vmatpush1.msra.mxu0 0.0
    %202 = vmatprep.subr.mxu0 0.0
    %203 = vmatpush1.msra.mxu0 0.0
    %204 = vmatprep.subr.mxu0 0.0
    %205 = vmatpush1.msra.mxu0 0.0
    %206 = vmatprep.subr.mxu0 0.0
    %207 = vmatpush1.msra.mxu0 0.0
    %208 = vmatprep.subr.mxu0 0.0
    %209 = vmatpush1.msra.mxu0 0.0
    %210 = vmatprep.subr.mxu0 0.0
    %211 = vmatpush1.msra.mxu0 0.0
    %212 = vmatprep.subr.mxu0 0.0
    %213 = vmatpush1.msra.mxu0 0.0
    %214 = vmatprep.subr.mxu0 0.0
    %215 = vmatpush1.msra.mxu0 0.0
    %216 = vmatprep.subr.mxu0 0.0
    %217 = vmatpush1.msra.mxu0 0.0
    %218 = vmatprep.mubr.f32.mxu0 0.0
    %v219 = vand.u32 %v53, 4294901760
    %220 = vmatmul.mubr.f32.gmra.mrb[0].mxu0 %v219
    %v221 = vpop.f32.mrb[0].mxu0
    %v222 = vadd.f32 %v131, %v221
    %v223 = vpop.f32.mrb[0].mxu0
    %224 = vdwg.mxu0
    %225 = vmatprep.subr.mxu0 0.0
    %v226 = vand.u32 %v43, 4294901760
    %v227 = vsub.f32 %v43, %v226
    %228 = vmatpush1.msra.mxu0 %v227
    %229 = vmatprep.subr.mxu0 0.0
    %v230 = vand.u32 %v44, 4294901760
    %v231 = vsub.f32 %v44, %v230
    %232 = vmatpush1.msra.mxu0 %v231
    %233 = vmatprep.subr.mxu0 0.0
    %v234 = vand.u32 %v45, 4294901760
    %v235 = vsub.f32 %v45, %v234
    %236 = vmatpush1.msra.mxu0 %v235
    %237 = vmatprep.subr.mxu0 0.0
    %v238 = vand.u32 %v46, 4294901760
    %v239 = vsub.f32 %v46, %v238
    %240 = vmatpush1.msra.mxu0 %v239
    %241 = vmatprep.subr.mxu0 0.0
    %242 = vmatpush1.msra.mxu0 0.0
    %243 = vmatprep.subr.mxu0 0.0
    %244 = vmatpush1.msra.mxu0 0.0
    %245 = vmatprep.subr.mxu0 0.0
    %246 = vmatpush1.msra.mxu0 0.0
    %247 = vmatprep.subr.mxu0 0.0
    %248 = vmatpush1.msra.mxu0 0.0
    %249 = vmatprep.subr.mxu0 0.0
    %250 = vmatpush1.msra.mxu0 0.0
    %251 = vmatprep.subr.mxu0 0.0
    %252 = vmatpush1.msra.mxu0 0.0
    %253 = vmatprep.subr.mxu0 0.0
    %254 = vmatpush1.msra.mxu0 0.0
    %255 = vmatprep.subr.mxu0 0.0
    %256 = vmatpush1.msra.mxu0 0.0
    %257 = vmatprep.subr.mxu0 0.0
    %258 = vmatpush1.msra.mxu0 0.0
    %259 = vmatprep.subr.mxu0 0.0
    %260 = vmatpush1.msra.mxu0 0.0
    %261 = vmatprep.subr.mxu0 0.0
    %262 = vmatpush1.msra.mxu0 0.0
    %263 = vmatprep.subr.mxu0 0.0
    %264 = vmatpush1.msra.mxu0 0.0
    %265 = vmatprep.subr.mxu0 0.0
    %266 = vmatpush1.msra.mxu0 0.0
    %267 = vmatprep.subr.mxu0 0.0
    %268 = vmatpush1.msra.mxu0 0.0
    %269 = vmatprep.subr.mxu0 0.0
    %270 = vmatpush1.msra.mxu0 0.0
    %271 = vmatprep.subr.mxu0 0.0
    %272 = vmatpush1.msra.mxu0 0.0
    %273 = vmatprep.subr.mxu0 0.0
    %274 = vmatpush1.msra.mxu0 0.0
    %275 = vmatprep.subr.mxu0 0.0
    %276 = vmatpush1.msra.mxu0 0.0
    %277 = vmatprep.subr.mxu0 0.0
    %278 = vmatpush1.msra.mxu0 0.0
    %279 = vmatprep.subr.mxu0 0.0
    %280 = vmatpush1.msra.mxu0 0.0
    %281 = vmatprep.subr.mxu0 0.0
    %282 = vmatpush1.msra.mxu0 0.0
    %283 = vmatprep.subr.mxu0 0.0
    %284 = vmatpush1.msra.mxu0 0.0
    %285 = vmatprep.subr.mxu0 0.0
    %286 = vmatpush1.msra.mxu0 0.0
    %287 = vmatprep.subr.mxu0 0.0
    %288 = vmatpush1.msra.mxu0 0.0
    %289 = vmatprep.subr.mxu0 0.0
    %290 = vmatpush1.msra.mxu0 0.0
    %291 = vmatprep.subr.mxu0 0.0
    %292 = vmatpush1.msra.mxu0 0.0
    %293 = vmatprep.subr.mxu0 0.0
    %294 = vmatpush1.msra.mxu0 0.0
    %295 = vmatprep.subr.mxu0 0.0
    %296 = vmatpush1.msra.mxu0 0.0
    %297 = vmatprep.mubr.f32.mxu0 0.0
    %v298 = vand.u32 %v53, 4294901760
    %v299 = vsub.f32 %v53, %v298
    %300 = vmatmul.mubr.f32.gmra.mrb[0].mxu0 %v299
    %v301 = vpop.f32.mrb[0].mxu0
    %v302 = vadd.f32 %v222, %v301
    %v303 = vpop.f32.mrb[0].mxu0
    %304 = vdwg.mxu0
    %305 = vmatprep.subr.mxu0 0.0
    %v306 = vand.u32 %v43, 4294901760
    %307 = vmatpush1.msra.mxu0 %v306
    %308 = vmatprep.subr.mxu0 0.0
    %v309 = vand.u32 %v44, 4294901760
    %310 = vmatpush1.msra.mxu0 %v309
    %311 = vmatprep.subr.mxu0 0.0
    %v312 = vand.u32 %v45, 4294901760
    %313 = vmatpush1.msra.mxu0 %v312
    %314 = vmatprep.subr.mxu0 0.0
    %v315 = vand.u32 %v46, 4294901760
    %316 = vmatpush1.msra.mxu0 %v315
    %317 = vmatprep.subr.mxu0 0.0
    %318 = vmatpush1.msra.mxu0 0.0
    %319 = vmatprep.subr.mxu0 0.0
    %320 = vmatpush1.msra.mxu0 0.0
    %321 = vmatprep.subr.mxu0 0.0
    %322 = vmatpush1.msra.mxu0 0.0
    %323 = vmatprep.subr.mxu0 0.0
    %324 = vmatpush1.msra.mxu0 0.0
    %325 = vmatprep.subr.mxu0 0.0
    %326 = vmatpush1.msra.mxu0 0.0
    %327 = vmatprep.subr.mxu0 0.0
    %328 = vmatpush1.msra.mxu0 0.0
    %329 = vmatprep.subr.mxu0 0.0
    %330 = vmatpush1.msra.mxu0 0.0
    %331 = vmatprep.subr.mxu0 0.0
    %332 = vmatpush1.msra.mxu0 0.0
    %333 = vmatprep.subr.mxu0 0.0
    %334 = vmatpush1.msra.mxu0 0.0
    %335 = vmatprep.subr.mxu0 0.0
    %336 = vmatpush1.msra.mxu0 0.0
    %337 = vmatprep.subr.mxu0 0.0
    %338 = vmatpush1.msra.mxu0 0.0
    %339 = vmatprep.subr.mxu0 0.0
    %340 = vmatpush1.msra.mxu0 0.0
    %341 = vmatprep.subr.mxu0 0.0
    %342 = vmatpush1.msra.mxu0 0.0
    %343 = vmatprep.subr.mxu0 0.0
    %344 = vmatpush1.msra.mxu0 0.0
    %345 = vmatprep.subr.mxu0 0.0
    %346 = vmatpush1.msra.mxu0 0.0
    %347 = vmatprep.subr.mxu0 0.0
    %348 = vmatpush1.msra.mxu0 0.0
    %349 = vmatprep.subr.mxu0 0.0
    %350 = vmatpush1.msra.mxu0 0.0
    %351 = vmatprep.subr.mxu0 0.0
    %352 = vmatpush1.msra.mxu0 0.0
    %353 = vmatprep.subr.mxu0 0.0
    %354 = vmatpush1.msra.mxu0 0.0
    %355 = vmatprep.subr.mxu0 0.0
    %356 = vmatpush1.msra.mxu0 0.0
    %357 = vmatprep.subr.mxu0 0.0
    %358 = vmatpush1.msra.mxu0 0.0
    %359 = vmatprep.subr.mxu0 0.0
    %360 = vmatpush1.msra.mxu0 0.0
    %361 = vmatprep.subr.mxu0 0.0
    %362 = vmatpush1.msra.mxu0 0.0
    %363 = vmatprep.subr.mxu0 0.0
    %364 = vmatpush1.msra.mxu0 0.0
    %365 = vmatprep.subr.mxu0 0.0
    %366 = vmatpush1.msra.mxu0 0.0
    %367 = vmatprep.subr.mxu0 0.0
    %368 = vmatpush1.msra.mxu0 0.0
    %369 = vmatprep.subr.mxu0 0.0
    %370 = vmatpush1.msra.mxu0 0.0
    %371 = vmatprep.subr.mxu0 0.0
    %372 = vmatpush1.msra.mxu0 0.0
    %373 = vmatprep.mubr.f32.mxu0 0.0
    %v374 = vand.u32 %v53, 4294901760
    %v375 = vsub.f32 %v53, %v374
    %v376 = vand.u32 %v375, 4294901760
    %377 = vmatmul.mubr.f32.gmra.mrb[0].mxu0 %v376
    %v378 = vpop.f32.mrb[0].mxu0
    %v379 = vadd.f32 %v302, %v378
    %v380 = vpop.f32.mrb[0].mxu0
    %381 = vdwg.mxu0
    %382 = vmatprep.subr.mxu0 0.0
    %v383 = vand.u32 %v43, 4294901760
    %v384 = vsub.f32 %v43, %v383
    %v385 = vand.u32 %v384, 4294901760
    %386 = vmatpush1.msra.mxu0 %v385
    %387 = vmatprep.subr.mxu0 0.0
    %v388 = vand.u32 %v44, 4294901760
    %v389 = vsub.f32 %v44, %v388
    %v390 = vand.u32 %v389, 4294901760
    %391 = vmatpush1.msra.mxu0 %v390
    %392 = vmatprep.subr.mxu0 0.0
    %v393 = vand.u32 %v45, 4294901760
    %v394 = vsub.f32 %v45, %v393
    %v395 = vand.u32 %v394, 4294901760
    %396 = vmatpush1.msra.mxu0 %v395
    %397 = vmatprep.subr.mxu0 0.0
    %v398 = vand.u32 %v46, 4294901760
    %v399 = vsub.f32 %v46, %v398
    %v400 = vand.u32 %v399, 4294901760
    %401 = vmatpush1.msra.mxu0 %v400
    %402 = vmatprep.subr.mxu0 0.0
    %403 = vmatpush1.msra.mxu0 0.0
    %404 = vmatprep.subr.mxu0 0.0
    %405 = vmatpush1.msra.mxu0 0.0
    %406 = vmatprep.subr.mxu0 0.0
    %407 = vmatpush1.msra.mxu0 0.0
    %408 = vmatprep.subr.mxu0 0.0
    %409 = vmatpush1.msra.mxu0 0.0
    %410 = vmatprep.subr.mxu0 0.0
    %411 = vmatpush1.msra.mxu0 0.0
    %412 = vmatprep.subr.mxu0 0.0
    %413 = vmatpush1.msra.mxu0 0.0
    %414 = vmatprep.subr.mxu0 0.0
    %415 = vmatpush1.msra.mxu0 0.0
    %416 = vmatprep.subr.mxu0 0.0
    %417 = vmatpush1.msra.mxu0 0.0
    %418 = vmatprep.subr.mxu0 0.0
    %419 = vmatpush1.msra.mxu0 0.0
    %420 = vmatprep.subr.mxu0 0.0
    %421 = vmatpush1.msra.mxu0 0.0
    %422 = vmatprep.subr.mxu0 0.0
    %423 = vmatpush1.msra.mxu0 0.0
    %424 = vmatprep.subr.mxu0 0.0
    %425 = vmatpush1.msra.mxu0 0.0
    %426 = vmatprep.subr.mxu0 0.0
    %427 = vmatpush1.msra.mxu0 0.0
    %428 = vmatprep.subr.mxu0 0.0
    %429 = vmatpush1.msra.mxu0 0.0
    %430 = vmatprep.subr.mxu0 0.0
    %431 = vmatpush1.msra.mxu0 0.0
    %432 = vmatprep.subr.mxu0 0.0
    %433 = vmatpush1.msra.mxu0 0.0
    %434 = vmatprep.subr.mxu0 0.0
    %435 = vmatpush1.msra.mxu0 0.0
    %436 = vmatprep.subr.mxu0 0.0
    %437 = vmatpush1.msra.mxu0 0.0
    %438 = vmatprep.subr.mxu0 0.0
    %439 = vmatpush1.msra.mxu0 0.0
    %440 = vmatprep.subr.mxu0 0.0
    %441 = vmatpush1.msra.mxu0 0.0
    %442 = vmatprep.subr.mxu0 0.0
    %443 = vmatpush1.msra.mxu0 0.0
    %444 = vmatprep.subr.mxu0 0.0
    %445 = vmatpush1.msra.mxu0 0.0
    %446 = vmatprep.subr.mxu0 0.0
    %447 = vmatpush1.msra.mxu0 0.0
    %448 = vmatprep.subr.mxu0 0.0
    %449 = vmatpush1.msra.mxu0 0.0
    %450 = vmatprep.subr.mxu0 0.0
    %451 = vmatpush1.msra.mxu0 0.0
    %452 = vmatprep.subr.mxu0 0.0
    %453 = vmatpush1.msra.mxu0 0.0
    %454 = vmatprep.subr.mxu0 0.0
    %455 = vmatpush1.msra.mxu0 0.0
    %456 = vmatprep.subr.mxu0 0.0
    %457 = vmatpush1.msra.mxu0 0.0
    %458 = vmatprep.mubr.f32.mxu0 0.0
    %v459 = vand.u32 %v53, 4294901760
    %460 = vmatmul.mubr.f32.gmra.mrb[0].mxu0 %v459
    %v461 = vpop.f32.mrb[0].mxu0
    %v462 = vadd.f32 %v379, %v461
    %v463 = vpop.f32.mrb[0].mxu0
    %464 = vdwg.mxu0
    %465 = vmatprep.subr.mxu0 0.0
    %v466 = vand.u32 %v43, 4294901760
    %467 = vmatpush1.msra.mxu0 %v466
    %468 = vmatprep.subr.mxu0 0.0
    %v469 = vand.u32 %v44, 4294901760
    %470 = vmatpush1.msra.mxu0 %v469
    %471 = vmatprep.subr.mxu0 0.0
    %v472 = vand.u32 %v45, 4294901760
    %473 = vmatpush1.msra.mxu0 %v472
    %474 = vmatprep.subr.mxu0 0.0
    %v475 = vand.u32 %v46, 4294901760
    %476 = vmatpush1.msra.mxu0 %v475
    %477 = vmatprep.subr.mxu0 0.0
    %478 = vmatpush1.msra.mxu0 0.0
    %479 = vmatprep.subr.mxu0 0.0
    %480 = vmatpush1.msra.mxu0 0.0
    %481 = vmatprep.subr.mxu0 0.0
    %482 = vmatpush1.msra.mxu0 0.0
    %483 = vmatprep.subr.mxu0 0.0
    %484 = vmatpush1.msra.mxu0 0.0
    %485 = vmatprep.subr.mxu0 0.0
    %486 = vmatpush1.msra.mxu0 0.0
    %487 = vmatprep.subr.mxu0 0.0
    %488 = vmatpush1.msra.mxu0 0.0
    %489 = vmatprep.subr.mxu0 0.0
    %490 = vmatpush1.msra.mxu0 0.0
    %491 = vmatprep.subr.mxu0 0.0
    %492 = vmatpush1.msra.mxu0 0.0
    %493 = vmatprep.subr.mxu0 0.0
    %494 = vmatpush1.msra.mxu0 0.0
    %495 = vmatprep.subr.mxu0 0.0
    %496 = vmatpush1.msra.mxu0 0.0
    %497 = vmatprep.subr.mxu0 0.0
    %498 = vmatpush1.msra.mxu0 0.0
    %499 = vmatprep.subr.mxu0 0.0
    %500 = vmatpush1.msra.mxu0 0.0
    %501 = vmatprep.subr.mxu0 0.0
    %502 = vmatpush1.msra.mxu0 0.0
    %503 = vmatprep.subr.mxu0 0.0
    %504 = vmatpush1.msra.mxu0 0.0
    %505 = vmatprep.subr.mxu0 0.0
    %506 = vmatpush1.msra.mxu0 0.0
    %507 = vmatprep.subr.mxu0 0.0
    %508 = vmatpush1.msra.mxu0 0.0
    %509 = vmatprep.subr.mxu0 0.0
    %510 = vmatpush1.msra.mxu0 0.0
    %511 = vmatprep.subr.mxu0 0.0
    %512 = vmatpush1.msra.mxu0 0.0
    %513 = vmatprep.subr.mxu0 0.0
    %514 = vmatpush1.msra.mxu0 0.0
    %515 = vmatprep.subr.mxu0 0.0
    %516 = vmatpush1.msra.mxu0 0.0
    %517 = vmatprep.subr.mxu0 0.0
    %518 = vmatpush1.msra.mxu0 0.0
    %519 = vmatprep.subr.mxu0 0.0
    %520 = vmatpush1.msra.mxu0 0.0
    %521 = vmatprep.subr.mxu0 0.0
    %522 = vmatpush1.msra.mxu0 0.0
    %523 = vmatprep.subr.mxu0 0.0
    %524 = vmatpush1.msra.mxu0 0.0
    %525 = vmatprep.subr.mxu0 0.0
    %526 = vmatpush1.msra.mxu0 0.0
    %527 = vmatprep.subr.mxu0 0.0
    %528 = vmatpush1.msra.mxu0 0.0
    %529 = vmatprep.subr.mxu0 0.0
    %530 = vmatpush1.msra.mxu0 0.0
    %531 = vmatprep.subr.mxu0 0.0
    %532 = vmatpush1.msra.mxu0 0.0
    %533 = vmatprep.mubr.f32.mxu0 0.0
    %v534 = vand.u32 %v53, 4294901760
    %535 = vmatmul.mubr.f32.gmra.mrb[0].mxu0 %v534
    %v536 = vpop.f32.mrb[0].mxu0
    %v537 = vadd.f32 %v462, %v536
    %v538 = vpop.f32.mrb[0].mxu0
    %539 = vdwg.mxu0
    %v540 = vmax.f32 %v537, 0.0
    %v541 = vld [vmem:[#allocation5 + $0x20] sm:$0xff]
    %v542 = vld [vmem:[#allocation5 + $0x28] sm:$0xff]
    %v543 = vld [vmem:[#allocation5 + $0x30] sm:$0xff]
    %v544 = vld [vmem:[#allocation5 + $0x38] sm:$0xff]
    %v545 = vld [vmem:[#allocation5 + $0x40] sm:$0xff]
    %v546 = vld [vmem:[#allocation5 + $0x48] sm:$0xff]
    %v547 = vld [vmem:[#allocation5 + $0x50] sm:$0xff]
    %v548 = vld [vmem:[#allocation5 + $0x58] sm:$0xff]
    %v549 = vld [vmem:[#allocation5 + $0x60] sm:$0xff]
    %v550 = vld [vmem:[#allocation5 + $0x68] sm:$0xff]
    %v551 = vld [vmem:[#allocation5 + $0x70] sm:$0xff]
    %v552 = vld [vmem:[#allocation5 + $0x78] sm:$0xff]
    %v553 = vld [vmem:[#allocation5 + $0x80] sm:$0xff]
    %v554 = vld [vmem:[#allocation5 + $0x88] sm:$0xff]
    %v555 = vld [vmem:[#allocation5 + $0x90] sm:$0xff]
    %v556 = vld [vmem:[#allocation5 + $0x98] sm:$0xff]
    %v557 = vlaneseq
    %v558 = vshrl.u32 %v557, 7
    %v559 = vsub.s32 1, %v558
    %v560 = vrot.slane %v42, %v559
    %561 = vmatprep.subr.mxu0 0.0
    %v562 = vand.u32 %v541, 4294901760
    %563 = vmatpush1.msra.mxu0 %v562
    %564 = vmatprep.subr.mxu0 0.0
    %v565 = vand.u32 %v542, 4294901760
    %566 = vmatpush1.msra.mxu0 %v565
    %567 = vmatprep.subr.mxu0 0.0
    %v568 = vand.u32 %v543, 4294901760
    %569 = vmatpush1.msra.mxu0 %v568
    %570 = vmatprep.subr.mxu0 0.0
    %v571 = vand.u32 %v544, 4294901760
    %572 = vmatpush1.msra.mxu0 %v571
    %573 = vmatprep.subr.mxu0 0.0
    %v574 = vand.u32 %v545, 4294901760
    %575 = vmatpush1.msra.mxu0 %v574
    %576 = vmatprep.subr.mxu0 0.0
    %v577 = vand.u32 %v546, 4294901760
    %578 = vmatpush1.msra.mxu0 %v577
    %579 = vmatprep.subr.mxu0 0.0
    %v580 = vand.u32 %v547, 4294901760
    %581 = vmatpush1.msra.mxu0 %v580
    %582 = vmatprep.subr.mxu0 0.0
    %v583 = vand.u32 %v548, 4294901760
    %584 = vmatpush1.msra.mxu0 %v583
    %585 = vmatprep.subr.mxu0 0.0
    %v586 = vand.u32 %v549, 4294901760
    %587 = vmatpush1.msra.mxu0 %v586
    %588 = vmatprep.subr.mxu0 0.0
    %v589 = vand.u32 %v550, 4294901760
    %590 = vmatpush1.msra.mxu0 %v589
    %591 = vmatprep.subr.mxu0 0.0
    %v592 = vand.u32 %v551, 4294901760
    %593 = vmatpush1.msra.mxu0 %v592
    %594 = vmatprep.subr.mxu0 0.0
    %v595 = vand.u32 %v552, 4294901760
    %596 = vmatpush1.msra.mxu0 %v595
    %597 = vmatprep.subr.mxu0 0.0
    %v598 = vand.u32 %v553, 4294901760
    %599 = vmatpush1.msra.mxu0 %v598
    %600 = vmatprep.subr.mxu0 0.0
    %v601 = vand.u32 %v554, 4294901760
    %602 = vmatpush1.msra.mxu0 %v601
    %603 = vmatprep.subr.mxu0 0.0
    %v604 = vand.u32 %v555, 4294901760
    %605 = vmatpush1.msra.mxu0 %v604
    %606 = vmatprep.subr.mxu0 0.0
    %v607 = vand.u32 %v556, 4294901760
    %608 = vmatpush1.msra.mxu0 %v607
    %609 = vmatprep.subr.mxu0 0.0
    %610 = vmatpush1.msra.mxu0 0.0
    %611 = vmatprep.subr.mxu0 0.0
    %612 = vmatpush1.msra.mxu0 0.0
    %613 = vmatprep.subr.mxu0 0.0
    %614 = vmatpush1.msra.mxu0 0.0
    %615 = vmatprep.subr.mxu0 0.0
    %616 = vmatpush1.msra.mxu0 0.0
    %617 = vmatprep.subr.mxu0 0.0
    %618 = vmatpush1.msra.mxu0 0.0
    %619 = vmatprep.subr.mxu0 0.0
    %620 = vmatpush1.msra.mxu0 0.0
    %621 = vmatprep.subr.mxu0 0.0
    %622 = vmatpush1.msra.mxu0 0.0
    %623 = vmatprep.subr.mxu0 0.0
    %624 = vmatpush1.msra.mxu0 0.0
    %625 = vmatprep.subr.mxu0 0.0
    %626 = vmatpush1.msra.mxu0 0.0
    %627 = vmatprep.subr.mxu0 0.0
    %628 = vmatpush1.msra.mxu0 0.0
    %629 = vmatprep.subr.mxu0 0.0
    %630 = vmatpush1.msra.mxu0 0.0
    %631 = vmatprep.subr.mxu0 0.0
    %632 = vmatpush1.msra.mxu0 0.0
    %633 = vmatprep.subr.mxu0 0.0
    %634 = vmatpush1.msra.mxu0 0.0
    %635 = vmatprep.subr.mxu0 0.0
    %636 = vmatpush1.msra.mxu0 0.0
    %637 = vmatprep.subr.mxu0 0.0
    %638 = vmatpush1.msra.mxu0 0.0
    %639 = vmatprep.subr.mxu0 0.0
    %640 = vmatpush1.msra.mxu0 0.0
    %641 = vmatprep.mubr.f32.mxu0 0.0
    %v642 = vand.u32 %v540, 4294901760
    %v643 = vsub.f32 %v540, %v642
    %v644 = vand.u32 %v643, 4294901760
    %v645 = vsub.f32 %v643, %v644
    %v646 = vand.u32 %v645, 4294901760
    %647 = vmatmul.mubr.f32.gmra.mrb[0].mxu0 %v646
    %v648 = vpop.f32.mrb[0].mxu0
    %v649 = vadd.f32 %v560, %v648
    %v650 = vpop.f32.mrb[0].mxu0
    %651 = vdwg.mxu0
    %652 = vmatprep.subr.mxu0 0.0
    %v653 = vand.u32 %v541, 4294901760
    %v654 = vsub.f32 %v541, %v653
    %v655 = vand.u32 %v654, 4294901760
    %v656 = vsub.f32 %v654, %v655
    %v657 = vand.u32 %v656, 4294901760
    %658 = vmatpush1.msra.mxu0 %v657
    %659 = vmatprep.subr.mxu0 0.0
    %v660 = vand.u32 %v542, 4294901760
    %v661 = vsub.f32 %v542, %v660
    %v662 = vand.u32 %v661, 4294901760
    %v663 = vsub.f32 %v661, %v662
    %v664 = vand.u32 %v663, 4294901760
    %665 = vmatpush1.msra.mxu0 %v664
    %666 = vmatprep.subr.mxu0 0.0
    %v667 = vand.u32 %v543, 4294901760
    %v668 = vsub.f32 %v543, %v667
    %v669 = vand.u32 %v668, 4294901760
    %v670 = vsub.f32 %v668, %v669
    %v671 = vand.u32 %v670, 4294901760
    %672 = vmatpush1.msra.mxu0 %v671
    %673 = vmatprep.subr.mxu0 0.0
    %v674 = vand.u32 %v544, 4294901760
    %v675 = vsub.f32 %v544, %v674
    %v676 = vand.u32 %v675, 4294901760
    %v677 = vsub.f32 %v675, %v676
    %v678 = vand.u32 %v677, 4294901760
    %679 = vmatpush1.msra.mxu0 %v678
    %680 = vmatprep.subr.mxu0 0.0
    %v681 = vand.u32 %v545, 4294901760
    %v682 = vsub.f32 %v545, %v681
    %v683 = vand.u32 %v682, 4294901760
    %v684 = vsub.f32 %v682, %v683
    %v685 = vand.u32 %v684, 4294901760
    %686 = vmatpush1.msra.mxu0 %v685
    %687 = vmatprep.subr.mxu0 0.0
    %v688 = vand.u32 %v546, 4294901760
    %v689 = vsub.f32 %v546, %v688
    %v690 = vand.u32 %v689, 4294901760
    %v691 = vsub.f32 %v689, %v690
    %v692 = vand.u32 %v691, 4294901760
    %693 = vmatpush1.msra.mxu0 %v692
    %694 = vmatprep.subr.mxu0 0.0
    %v695 = vand.u32 %v547, 4294901760
    %v696 = vsub.f32 %v547, %v695
    %v697 = vand.u32 %v696, 4294901760
    %v698 = vsub.f32 %v696, %v697
    %v699 = vand.u32 %v698, 4294901760
    %700 = vmatpush1.msra.mxu0 %v699
    %701 = vmatprep.subr.mxu0 0.0
    %v702 = vand.u32 %v548, 4294901760
    %v703 = vsub.f32 %v548, %v702
    %v704 = vand.u32 %v703, 4294901760
    %v705 = vsub.f32 %v703, %v704
    %v706 = vand.u32 %v705, 4294901760
    %707 = vmatpush1.msra.mxu0 %v706
    %708 = vmatprep.subr.mxu0 0.0
    %v709 = vand.u32 %v549, 4294901760
    %v710 = vsub.f32 %v549, %v709
    %v711 = vand.u32 %v710, 4294901760
    %v712 = vsub.f32 %v710, %v711
    %v713 = vand.u32 %v712, 4294901760
    %714 = vmatpush1.msra.mxu0 %v713
    %715 = vmatprep.subr.mxu0 0.0
    %v716 = vand.u32 %v550, 4294901760
    %v717 = vsub.f32 %v550, %v716
    %v718 = vand.u32 %v717, 4294901760
    %v719 = vsub.f32 %v717, %v718
    %v720 = vand.u32 %v719, 4294901760
    %721 = vmatpush1.msra.mxu0 %v720
    %722 = vmatprep.subr.mxu0 0.0
    %v723 = vand.u32 %v551, 4294901760
    %v724 = vsub.f32 %v551, %v723
    %v725 = vand.u32 %v724, 4294901760
    %v726 = vsub.f32 %v724, %v725
    %v727 = vand.u32 %v726, 4294901760
    %728 = vmatpush1.msra.mxu0 %v727
    %729 = vmatprep.subr.mxu0 0.0
    %v730 = vand.u32 %v552, 4294901760
    %v731 = vsub.f32 %v552, %v730
    %v732 = vand.u32 %v731, 4294901760
    %v733 = vsub.f32 %v731, %v732
    %v734 = vand.u32 %v733, 4294901760
    %735 = vmatpush1.msra.mxu0 %v734
    %736 = vmatprep.subr.mxu0 0.0
    %v737 = vand.u32 %v553, 4294901760
    %v738 = vsub.f32 %v553, %v737
    %v739 = vand.u32 %v738, 4294901760
    %v740 = vsub.f32 %v738, %v739
    %v741 = vand.u32 %v740, 4294901760
    %742 = vmatpush1.msra.mxu0 %v741
    %743 = vmatprep.subr.mxu0 0.0
    %v744 = vand.u32 %v554, 4294901760
    %v745 = vsub.f32 %v554, %v744
    %v746 = vand.u32 %v745, 4294901760
    %v747 = vsub.f32 %v745, %v746
    %v748 = vand.u32 %v747, 4294901760
    %749 = vmatpush1.msra.mxu0 %v748
    %750 = vmatprep.subr.mxu0 0.0
    %v751 = vand.u32 %v555, 4294901760
    %v752 = vsub.f32 %v555, %v751
    %v753 = vand.u32 %v752, 4294901760
    %v754 = vsub.f32 %v752, %v753
    %v755 = vand.u32 %v754, 4294901760
    %756 = vmatpush1.msra.mxu0 %v755
    %757 = vmatprep.subr.mxu0 0.0
    %v758 = vand.u32 %v556, 4294901760
    %v759 = vsub.f32 %v556, %v758
    %v760 = vand.u32 %v759, 4294901760
    %v761 = vsub.f32 %v759, %v760
    %v762 = vand.u32 %v761, 4294901760
    %763 = vmatpush1.msra.mxu0 %v762
    %764 = vmatprep.subr.mxu0 0.0
    %765 = vmatpush1.msra.mxu0 0.0
    %766 = vmatprep.subr.mxu0 0.0
    %767 = vmatpush1.msra.mxu0 0.0
    %768 = vmatprep.subr.mxu0 0.0
    %769 = vmatpush1.msra.mxu0 0.0
    %770 = vmatprep.subr.mxu0 0.0
    %771 = vmatpush1.msra.mxu0 0.0
    %772 = vmatprep.subr.mxu0 0.0
    %773 = vmatpush1.msra.mxu0 0.0
    %774 = vmatprep.subr.mxu0 0.0
    %775 = vmatpush1.msra.mxu0 0.0
    %776 = vmatprep.subr.mxu0 0.0
    %777 = vmatpush1.msra.mxu0 0.0
    %778 = vmatprep.subr.mxu0 0.0
    %779 = vmatpush1.msra.mxu0 0.0
    %780 = vmatprep.subr.mxu0 0.0
    %781 = vmatpush1.msra.mxu0 0.0
    %782 = vmatprep.subr.mxu0 0.0
    %783 = vmatpush1.msra.mxu0 0.0
    %784 = vmatprep.subr.mxu0 0.0
    %785 = vmatpush1.msra.mxu0 0.0
    %786 = vmatprep.subr.mxu0 0.0
    %787 = vmatpush1.msra.mxu0 0.0
    %788 = vmatprep.subr.mxu0 0.0
    %789 = vmatpush1.msra.mxu0 0.0
    %790 = vmatprep.subr.mxu0 0.0
    %791 = vmatpush1.msra.mxu0 0.0
    %792 = vmatprep.subr.mxu0 0.0
    %793 = vmatpush1.msra.mxu0 0.0
    %794 = vmatprep.subr.mxu0 0.0
    %795 = vmatpush1.msra.mxu0 0.0
    %796 = vmatprep.mubr.f32.mxu0 0.0
    %v797 = vand.u32 %v540, 4294901760
    %798 = vmatmul.mubr.f32.gmra.mrb[0].mxu0 %v797
    %v799 = vpop.f32.mrb[0].mxu0
    %v800 = vadd.f32 %v649, %v799
    %v801 = vpop.f32.mrb[0].mxu0
    %802 = vdwg.mxu0
    %803 = vmatprep.subr.mxu0 0.0
    %v804 = vand.u32 %v541, 4294901760
    %v805 = vsub.f32 %v541, %v804
    %806 = vmatpush1.msra.mxu0 %v805
    %807 = vmatprep.subr.mxu0 0.0
    %v808 = vand.u32 %v542, 4294901760
    %v809 = vsub.f32 %v542, %v808
    %810 = vmatpush1.msra.mxu0 %v809
    %811 = vmatprep.subr.mxu0 0.0
    %v812 = vand.u32 %v543, 4294901760
    %v813 = vsub.f32 %v543, %v812
    %814 = vmatpush1.msra.mxu0 %v813
    %815 = vmatprep.subr.mxu0 0.0
    %v816 = vand.u32 %v544, 4294901760
    %v817 = vsub.f32 %v544, %v816
    %818 = vmatpush1.msra.mxu0 %v817
    %819 = vmatprep.subr.mxu0 0.0
    %v820 = vand.u32 %v545, 4294901760
    %v821 = vsub.f32 %v545, %v820
    %822 = vmatpush1.msra.mxu0 %v821
    %823 = vmatprep.subr.mxu0 0.0
    %v824 = vand.u32 %v546, 4294901760
    %v825 = vsub.f32 %v546, %v824
    %826 = vmatpush1.msra.mxu0 %v825
    %827 = vmatprep.subr.mxu0 0.0
    %v828 = vand.u32 %v547, 4294901760
    %v829 = vsub.f32 %v547, %v828
    %830 = vmatpush1.msra.mxu0 %v829
    %831 = vmatprep.subr.mxu0 0.0
    %v832 = vand.u32 %v548, 4294901760
    %v833 = vsub.f32 %v548, %v832
    %834 = vmatpush1.msra.mxu0 %v833
    %835 = vmatprep.subr.mxu0 0.0
    %v836 = vand.u32 %v549, 4294901760
    %v837 = vsub.f32 %v549, %v836
    %838 = vmatpush1.msra.mxu0 %v837
    %839 = vmatprep.subr.mxu0 0.0
    %v840 = vand.u32 %v550, 4294901760
    %v841 = vsub.f32 %v550, %v840
    %842 = vmatpush1.msra.mxu0 %v841
    %843 = vmatprep.subr.mxu0 0.0
    %v844 = vand.u32 %v551, 4294901760
    %v845 = vsub.f32 %v551, %v844
    %846 = vmatpush1.msra.mxu0 %v845
    %847 = vmatprep.subr.mxu0 0.0
    %v848 = vand.u32 %v552, 4294901760
    %v849 = vsub.f32 %v552, %v848
    %850 = vmatpush1.msra.mxu0 %v849
    %851 = vmatprep.subr.mxu0 0.0
    %v852 = vand.u32 %v553, 4294901760
    %v853 = vsub.f32 %v553, %v852
    %854 = vmatpush1.msra.mxu0 %v853
    %855 = vmatprep.subr.mxu0 0.0
    %v856 = vand.u32 %v554, 4294901760
    %v857 = vsub.f32 %v554, %v856
    %858 = vmatpush1.msra.mxu0 %v857
    %859 = vmatprep.subr.mxu0 0.0
    %v860 = vand.u32 %v555, 4294901760
    %v861 = vsub.f32 %v555, %v860
    %862 = vmatpush1.msra.mxu0 %v861
    %863 = vmatprep.subr.mxu0 0.0
    %v864 = vand.u32 %v556, 4294901760
    %v865 = vsub.f32 %v556, %v864
    %866 = vmatpush1.msra.mxu0 %v865
    %867 = vmatprep.subr.mxu0 0.0
    %868 = vmatpush1.msra.mxu0 0.0
    %869 = vmatprep.subr.mxu0 0.0
    %870 = vmatpush1.msra.mxu0 0.0
    %871 = vmatprep.subr.mxu0 0.0
    %872 = vmatpush1.msra.mxu0 0.0
    %873 = vmatprep.subr.mxu0 0.0
    %874 = vmatpush1.msra.mxu0 0.0
    %875 = vmatprep.subr.mxu0 0.0
    %876 = vmatpush1.msra.mxu0 0.0
    %877 = vmatprep.subr.mxu0 0.0
    %878 = vmatpush1.msra.mxu0 0.0
    %879 = vmatprep.subr.mxu0 0.0
    %880 = vmatpush1.msra.mxu0 0.0
    %881 = vmatprep.subr.mxu0 0.0
    %882 = vmatpush1.msra.mxu0 0.0
    %883 = vmatprep.subr.mxu0 0.0
    %884 = vmatpush1.msra.mxu0 0.0
    %885 = vmatprep.subr.mxu0 0.0
    %886 = vmatpush1.msra.mxu0 0.0
    %887 = vmatprep.subr.mxu0 0.0
    %888 = vmatpush1.msra.mxu0 0.0
    %889 = vmatprep.subr.mxu0 0.0
    %890 = vmatpush1.msra.mxu0 0.0
    %891 = vmatprep.subr.mxu0 0.0
    %892 = vmatpush1.msra.mxu0 0.0
    %893 = vmatprep.subr.mxu0 0.0
    %894 = vmatpush1.msra.mxu0 0.0
    %895 = vmatprep.subr.mxu0 0.0
    %896 = vmatpush1.msra.mxu0 0.0
    %897 = vmatprep.subr.mxu0 0.0
    %898 = vmatpush1.msra.mxu0 0.0
    %899 = vmatprep.mubr.f32.mxu0 0.0
    %v900 = vand.u32 %v540, 4294901760
    %v901 = vsub.f32 %v540, %v900
    %902 = vmatmul.mubr.f32.gmra.mrb[0].mxu0 %v901
    %v903 = vpop.f32.mrb[0].mxu0
    %v904 = vadd.f32 %v800, %v903
    %v905 = vpop.f32.mrb[0].mxu0
    %906 = vdwg.mxu0
    %907 = vmatprep.subr.mxu0 0.0
    %v908 = vand.u32 %v541, 4294901760
    %909 = vmatpush1.msra.mxu0 %v908
    %910 = vmatprep.subr.mxu0 0.0
    %v911 = vand.u32 %v542, 4294901760
    %912 = vmatpush1.msra.mxu0 %v911
    %913 = vmatprep.subr.mxu0 0.0
    %v914 = vand.u32 %v543, 4294901760
    %915 = vmatpush1.msra.mxu0 %v914
    %916 = vmatprep.subr.mxu0 0.0
    %v917 = vand.u32 %v544, 4294901760
    %918 = vmatpush1.msra.mxu0 %v917
    %919 = vmatprep.subr.mxu0 0.0
    %v920 = vand.u32 %v545, 4294901760
    %921 = vmatpush1.msra.mxu0 %v920
    %922 = vmatprep.subr.mxu0 0.0
    %v923 = vand.u32 %v546, 4294901760
    %924 = vmatpush1.msra.mxu0 %v923
    %925 = vmatprep.subr.mxu0 0.0
    %v926 = vand.u32 %v547, 4294901760
    %927 = vmatpush1.msra.mxu0 %v926
    %928 = vmatprep.subr.mxu0 0.0
    %v929 = vand.u32 %v548, 4294901760
    %930 = vmatpush1.msra.mxu0 %v929
    %931 = vmatprep.subr.mxu0 0.0
    %v932 = vand.u32 %v549, 4294901760
    %933 = vmatpush1.msra.mxu0 %v932
    %934 = vmatprep.subr.mxu0 0.0
    %v935 = vand.u32 %v550, 4294901760
    %936 = vmatpush1.msra.mxu0 %v935
    %937 = vmatprep.subr.mxu0 0.0
    %v938 = vand.u32 %v551, 4294901760
    %939 = vmatpush1.msra.mxu0 %v938
    %940 = vmatprep.subr.mxu0 0.0
    %v941 = vand.u32 %v552, 4294901760
    %942 = vmatpush1.msra.mxu0 %v941
    %943 = vmatprep.subr.mxu0 0.0
    %v944 = vand.u32 %v553, 4294901760
    %945 = vmatpush1.msra.mxu0 %v944
    %946 = vmatprep.subr.mxu0 0.0
    %v947 = vand.u32 %v554, 4294901760
    %948 = vmatpush1.msra.mxu0 %v947
    %949 = vmatprep.subr.mxu0 0.0
    %v950 = vand.u32 %v555, 4294901760
    %951 = vmatpush1.msra.mxu0 %v950
    %952 = vmatprep.subr.mxu0 0.0
    %v953 = vand.u32 %v556, 4294901760
    %954 = vmatpush1.msra.mxu0 %v953
    %955 = vmatprep.subr.mxu0 0.0
    %956 = vmatpush1.msra.mxu0 0.0
    %957 = vmatprep.subr.mxu0 0.0
    %958 = vmatpush1.msra.mxu0 0.0
    %959 = vmatprep.subr.mxu0 0.0
    %960 = vmatpush1.msra.mxu0 0.0
    %961 = vmatprep.subr.mxu0 0.0
    %962 = vmatpush1.msra.mxu0 0.0
    %963 = vmatprep.subr.mxu0 0.0
    %964 = vmatpush1.msra.mxu0 0.0
    %965 = vmatprep.subr.mxu0 0.0
    %966 = vmatpush1.msra.mxu0 0.0
    %967 = vmatprep.subr.mxu0 0.0
    %968 = vmatpush1.msra.mxu0 0.0
    %969 = vmatprep.subr.mxu0 0.0
    %970 = vmatpush1.msra.mxu0 0.0
    %971 = vmatprep.subr.mxu0 0.0
    %972 = vmatpush1.msra.mxu0 0.0
    %973 = vmatprep.subr.mxu0 0.0
    %974 = vmatpush1.msra.mxu0 0.0
    %975 = vmatprep.subr.mxu0 0.0
    %976 = vmatpush1.msra.mxu0 0.0
    %977 = vmatprep.subr.mxu0 0.0
    %978 = vmatpush1.msra.mxu0 0.0
    %979 = vmatprep.subr.mxu0 0.0
    %980 = vmatpush1.msra.mxu0 0.0
    %981 = vmatprep.subr.mxu0 0.0
    %982 = vmatpush1.msra.mxu0 0.0
    %983 = vmatprep.subr.mxu0 0.0
    %984 = vmatpush1.msra.mxu0 0.0
    %985 = vmatprep.subr.mxu0 0.0
    %986 = vmatpush1.msra.mxu0 0.0
    %987 = vmatprep.mubr.f32.mxu0 0.0
    %v988 = vand.u32 %v540, 4294901760
    %v989 = vsub.f32 %v540, %v988
    %v990 = vand.u32 %v989, 4294901760
    %991 = vmatmul.mubr.f32.gmra.mrb[0].mxu0 %v990
    %v992 = vpop.f32.mrb[0].mxu0
    %v993 = vadd.f32 %v904, %v992
    %v994 = vpop.f32.mrb[0].mxu0
    %995 = vdwg.mxu0
    %996 = vmatprep.subr.mxu0 0.0
    %v997 = vand.u32 %v541, 4294901760
    %v998 = vsub.f32 %v541, %v997
    %v999 = vand.u32 %v998, 4294901760
    %1000 = vmatpush1.msra.mxu0 %v999
    %1001 = vmatprep.subr.mxu0 0.0
    %v1002 = vand.u32 %v542, 4294901760
    %v1003 = vsub.f32 %v542, %v1002
    %v1004 = vand.u32 %v1003, 4294901760
    %1005 = vmatpush1.msra.mxu0 %v1004
    %1006 = vmatprep.subr.mxu0 0.0
    %v1007 = vand.u32 %v543, 4294901760
    %v1008 = vsub.f32 %v543, %v1007
    %v1009 = vand.u32 %v1008, 4294901760
    %1010 = vmatpush1.msra.mxu0 %v1009
    %1011 = vmatprep.subr.mxu0 0.0
    %v1012 = vand.u32 %v544, 4294901760
    %v1013 = vsub.f32 %v544, %v1012
    %v1014 = vand.u32 %v1013, 4294901760
    %1015 = vmatpush1.msra.mxu0 %v1014
    %1016 = vmatprep.subr.mxu0 0.0
    %v1017 = vand.u32 %v545, 4294901760
    %v1018 = vsub.f32 %v545, %v1017
    %v1019 = vand.u32 %v1018, 4294901760
    %1020 = vmatpush1.msra.mxu0 %v1019
    %1021 = vmatprep.subr.mxu0 0.0
    %v1022 = vand.u32 %v546, 4294901760
    %v1023 = vsub.f32 %v546, %v1022
    %v1024 = vand.u32 %v1023, 4294901760
    %1025 = vmatpush1.msra.mxu0 %v1024
    %1026 = vmatprep.subr.mxu0 0.0
    %v1027 = vand.u32 %v547, 4294901760
    %v1028 = vsub.f32 %v547, %v1027
    %v1029 = vand.u32 %v1028, 4294901760
    %1030 = vmatpush1.msra.mxu0 %v1029
    %1031 = vmatprep.subr.mxu0 0.0
    %v1032 = vand.u32 %v548, 4294901760
    %v1033 = vsub.f32 %v548, %v1032
    %v1034 = vand.u32 %v1033, 4294901760
    %1035 = vmatpush1.msra.mxu0 %v1034
    %1036 = vmatprep.subr.mxu0 0.0
    %v1037 = vand.u32 %v549, 4294901760
    %v1038 = vsub.f32 %v549, %v1037
    %v1039 = vand.u32 %v1038, 4294901760
    %1040 = vmatpush1.msra.mxu0 %v1039
    %1041 = vmatprep.subr.mxu0 0.0
    %v1042 = vand.u32 %v550, 4294901760
    %v1043 = vsub.f32 %v550, %v1042
    %v1044 = vand.u32 %v1043, 4294901760
    %1045 = vmatpush1.msra.mxu0 %v1044
    %1046 = vmatprep.subr.mxu0 0.0
    %v1047 = vand.u32 %v551, 4294901760
    %v1048 = vsub.f32 %v551, %v1047
    %v1049 = vand.u32 %v1048, 4294901760
    %1050 = vmatpush1.msra.mxu0 %v1049
    %1051 = vmatprep.subr.mxu0 0.0
    %v1052 = vand.u32 %v552, 4294901760
    %v1053 = vsub.f32 %v552, %v1052
    %v1054 = vand.u32 %v1053, 4294901760
    %1055 = vmatpush1.msra.mxu0 %v1054
    %1056 = vmatprep.subr.mxu0 0.0
    %v1057 = vand.u32 %v553, 4294901760
    %v1058 = vsub.f32 %v553, %v1057
    %v1059 = vand.u32 %v1058, 4294901760
    %1060 = vmatpush1.msra.mxu0 %v1059
    %1061 = vmatprep.subr.mxu0 0.0
    %v1062 = vand.u32 %v554, 4294901760
    %v1063 = vsub.f32 %v554, %v1062
    %v1064 = vand.u32 %v1063, 4294901760
    %1065 = vmatpush1.msra.mxu0 %v1064
    %1066 = vmatprep.subr.mxu0 0.0
    %v1067 = vand.u32 %v555, 4294901760
    %v1068 = vsub.f32 %v555, %v1067
    %v1069 = vand.u32 %v1068, 4294901760
    %1070 = vmatpush1.msra.mxu0 %v1069
    %1071 = vmatprep.subr.mxu0 0.0
    %v1072 = vand.u32 %v556, 4294901760
    %v1073 = vsub.f32 %v556, %v1072
    %v1074 = vand.u32 %v1073, 4294901760
    %1075 = vmatpush1.msra.mxu0 %v1074
    %1076 = vmatprep.subr.mxu0 0.0
    %1077 = vmatpush1.msra.mxu0 0.0
    %1078 = vmatprep.subr.mxu0 0.0
    %1079 = vmatpush1.msra.mxu0 0.0
    %1080 = vmatprep.subr.mxu0 0.0
    %1081 = vmatpush1.msra.mxu0 0.0
    %1082 = vmatprep.subr.mxu0 0.0
    %1083 = vmatpush1.msra.mxu0 0.0
    %1084 = vmatprep.subr.mxu0 0.0
    %1085 = vmatpush1.msra.mxu0 0.0
    %1086 = vmatprep.subr.mxu0 0.0
    %1087 = vmatpush1.msra.mxu0 0.0
    %1088 = vmatprep.subr.mxu0 0.0
    %1089 = vmatpush1.msra.mxu0 0.0
    %1090 = vmatprep.subr.mxu0 0.0
    %1091 = vmatpush1.msra.mxu0 0.0
    %1092 = vmatprep.subr.mxu0 0.0
    %1093 = vmatpush1.msra.mxu0 0.0
    %1094 = vmatprep.subr.mxu0 0.0
    %1095 = vmatpush1.msra.mxu0 0.0
    %1096 = vmatprep.subr.mxu0 0.0
    %1097 = vmatpush1.msra.mxu0 0.0
    %1098 = vmatprep.subr.mxu0 0.0
    %1099 = vmatpush1.msra.mxu0 0.0
    %1100 = vmatprep.subr.mxu0 0.0
    %1101 = vmatpush1.msra.mxu0 0.0
    %1102 = vmatprep.subr.mxu0 0.0
    %1103 = vmatpush1.msra.mxu0 0.0
    %1104 = vmatprep.subr.mxu0 0.0
    %1105 = vmatpush1.msra.mxu0 0.0
    %1106 = vmatprep.subr.mxu0 0.0
    %1107 = vmatpush1.msra.mxu0 0.0
    %1108 = vmatprep.mubr.f32.mxu0 0.0
    %v1109 = vand.u32 %v540, 4294901760
    %1110 = vmatmul.mubr.f32.gmra.mrb[0].mxu0 %v1109
    %v1111 = vpop.f32.mrb[0].mxu0
    %v1112 = vadd.f32 %v993, %v1111
    %v1113 = vpop.f32.mrb[0].mxu0
    %1114 = vdwg.mxu0
    %1115 = vmatprep.subr.mxu0 0.0
    %v1116 = vand.u32 %v541, 4294901760
    %1117 = vmatpush1.msra.mxu0 %v1116
    %1118 = vmatprep.subr.mxu0 0.0
    %v1119 = vand.u32 %v542, 4294901760
    %1120 = vmatpush1.msra.mxu0 %v1119
    %1121 = vmatprep.subr.mxu0 0.0
    %v1122 = vand.u32 %v543, 4294901760
    %1123 = vmatpush1.msra.mxu0 %v1122
    %1124 = vmatprep.subr.mxu0 0.0
    %v1125 = vand.u32 %v544, 4294901760
    %1126 = vmatpush1.msra.mxu0 %v1125
    %1127 = vmatprep.subr.mxu0 0.0
    %v1128 = vand.u32 %v545, 4294901760
    %1129 = vmatpush1.msra.mxu0 %v1128
    %1130 = vmatprep.subr.mxu0 0.0
    %v1131 = vand.u32 %v546, 4294901760
    %1132 = vmatpush1.msra.mxu0 %v1131
    %1133 = vmatprep.subr.mxu0 0.0
    %v1134 = vand.u32 %v547, 4294901760
    %1135 = vmatpush1.msra.mxu0 %v1134
    %1136 = vmatprep.subr.mxu0 0.0
    %v1137 = vand.u32 %v548, 4294901760
    %1138 = vmatpush1.msra.mxu0 %v1137
    %1139 = vmatprep.subr.mxu0 0.0
    %v1140 = vand.u32 %v549, 4294901760
    %1141 = vmatpush1.msra.mxu0 %v1140
    %1142 = vmatprep.subr.mxu0 0.0
    %v1143 = vand.u32 %v550, 4294901760
    %1144 = vmatpush1.msra.mxu0 %v1143
    %1145 = vmatprep.subr.mxu0 0.0
    %v1146 = vand.u32 %v551, 4294901760
    %1147 = vmatpush1.msra.mxu0 %v1146
    %1148 = vmatprep.subr.mxu0 0.0
    %v1149 = vand.u32 %v552, 4294901760
    %1150 = vmatpush1.msra.mxu0 %v1149
    %1151 = vmatprep.subr.mxu0 0.0
    %v1152 = vand.u32 %v553, 4294901760
    %1153 = vmatpush1.msra.mxu0 %v1152
    %1154 = vmatprep.subr.mxu0 0.0
    %v1155 = vand.u32 %v554, 4294901760
    %1156 = vmatpush1.msra.mxu0 %v1155
    %1157 = vmatprep.subr.mxu0 0.0
    %v1158 = vand.u32 %v555, 4294901760
    %1159 = vmatpush1.msra.mxu0 %v1158
    %1160 = vmatprep.subr.mxu0 0.0
    %v1161 = vand.u32 %v556, 4294901760
    %1162 = vmatpush1.msra.mxu0 %v1161
    %1163 = vmatprep.subr.mxu0 0.0
    %1164 = vmatpush1.msra.mxu0 0.0
    %1165 = vmatprep.subr.mxu0 0.0
    %1166 = vmatpush1.msra.mxu0 0.0
    %1167 = vmatprep.subr.mxu0 0.0
    %1168 = vmatpush1.msra.mxu0 0.0
    %1169 = vmatprep.subr.mxu0 0.0
    %1170 = vmatpush1.msra.mxu0 0.0
    %1171 = vmatprep.subr.mxu0 0.0
    %1172 = vmatpush1.msra.mxu0 0.0
    %1173 = vmatprep.subr.mxu0 0.0
    %1174 = vmatpush1.msra.mxu0 0.0
    %1175 = vmatprep.subr.mxu0 0.0
    %1176 = vmatpush1.msra.mxu0 0.0
    %1177 = vmatprep.subr.mxu0 0.0
    %1178 = vmatpush1.msra.mxu0 0.0
    %1179 = vmatprep.subr.mxu0 0.0
    %1180 = vmatpush1.msra.mxu0 0.0
    %1181 = vmatprep.subr.mxu0 0.0
    %1182 = vmatpush1.msra.mxu0 0.0
    %1183 = vmatprep.subr.mxu0 0.0
    %1184 = vmatpush1.msra.mxu0 0.0
    %1185 = vmatprep.subr.mxu0 0.0
    %1186 = vmatpush1.msra.mxu0 0.0
    %1187 = vmatprep.subr.mxu0 0.0
    %1188 = vmatpush1.msra.mxu0 0.0
    %1189 = vmatprep.subr.mxu0 0.0
    %1190 = vmatpush1.msra.mxu0 0.0
    %1191 = vmatprep.subr.mxu0 0.0
    %1192 = vmatpush1.msra.mxu0 0.0
    %1193 = vmatprep.subr.mxu0 0.0
    %1194 = vmatpush1.msra.mxu0 0.0
    %1195 = vmatprep.mubr.f32.mxu0 0.0
    %v1196 = vand.u32 %v540, 4294901760
    %1197 = vmatmul.mubr.f32.gmra.mrb[0].mxu0 %v1196
    %v1198 = vpop.f32.mrb[0].mxu0
    %v1199 = vadd.f32 %v1112, %v1198
    %v1200 = vpop.f32.mrb[0].mxu0
    %1201 = vdwg.mxu0
    %v1202 = vmax.f32 %v1199, 0.0
    %v1203 = vld [vmem:[#allocation5 + $0xa0] sm:$0xff]
    %v1204 = vld [vmem:[#allocation5 + $0xa8] sm:$0xff]
    %v1205 = vld [vmem:[#allocation5 + $0xb0] sm:$0xff]
    %v1206 = vld [vmem:[#allocation5 + $0xb8] sm:$0xff]
    %v1207 = vld [vmem:[#allocation5 + $0xc0] sm:$0xff]
    %v1208 = vld [vmem:[#allocation5 + $0xc8] sm:$0xff]
    %v1209 = vld [vmem:[#allocation5 + $0xd0] sm:$0xff]
    %v1210 = vld [vmem:[#allocation5 + $0xd8] sm:$0xff]
    %v1211 = vld [vmem:[#allocation5 + $0xe0] sm:$0xff]
    %v1212 = vld [vmem:[#allocation5 + $0xe8] sm:$0xff]
    %v1213 = vld [vmem:[#allocation5 + $0xf0] sm:$0xff]
    %v1214 = vld [vmem:[#allocation5 + $0xf8] sm:$0xff]
    %v1215 = vld [vmem:[#allocation5 + $0x100] sm:$0xff]
    %v1216 = vld [vmem:[#allocation5 + $0x108] sm:$0xff]
    %v1217 = vld [vmem:[#allocation5 + $0x110] sm:$0xff]
    %v1218 = vld [vmem:[#allocation5 + $0x118] sm:$0xff]
    %v1219 = vlaneseq
    %v1220 = vshrl.u32 %v1219, 7
    %v1221 = vsub.s32 2, %v1220
    %v1222 = vrot.slane %v42, %v1221
    %1223 = vmatprep.subr.mxu0 0.0
    %v1224 = vand.u32 %v1203, 4294901760
    %1225 = vmatpush1.msra.mxu0 %v1224
    %1226 = vmatprep.subr.mxu0 0.0
    %v1227 = vand.u32 %v1204, 4294901760
    %1228 = vmatpush1.msra.mxu0 %v1227
    %1229 = vmatprep.subr.mxu0 0.0
    %v1230 = vand.u32 %v1205, 4294901760
    %1231 = vmatpush1.msra.mxu0 %v1230
    %1232 = vmatprep.subr.mxu0 0.0
    %v1233 = vand.u32 %v1206, 4294901760
    %1234 = vmatpush1.msra.mxu0 %v1233
    %1235 = vmatprep.subr.mxu0 0.0
    %v1236 = vand.u32 %v1207, 4294901760
    %1237 = vmatpush1.msra.mxu0 %v1236
    %1238 = vmatprep.subr.mxu0 0.0
    %v1239 = vand.u32 %v1208, 4294901760
    %1240 = vmatpush1.msra.mxu0 %v1239
    %1241 = vmatprep.subr.mxu0 0.0
    %v1242 = vand.u32 %v1209, 4294901760
    %1243 = vmatpush1.msra.mxu0 %v1242
    %1244 = vmatprep.subr.mxu0 0.0
    %v1245 = vand.u32 %v1210, 4294901760
    %1246 = vmatpush1.msra.mxu0 %v1245
    %1247 = vmatprep.subr.mxu0 0.0
    %v1248 = vand.u32 %v1211, 4294901760
    %1249 = vmatpush1.msra.mxu0 %v1248
    %1250 = vmatprep.subr.mxu0 0.0
    %v1251 = vand.u32 %v1212, 4294901760
    %1252 = vmatpush1.msra.mxu0 %v1251
    %1253 = vmatprep.subr.mxu0 0.0
    %v1254 = vand.u32 %v1213, 4294901760
    %1255 = vmatpush1.msra.mxu0 %v1254
    %1256 = vmatprep.subr.mxu0 0.0
    %v1257 = vand.u32 %v1214, 4294901760
    %1258 = vmatpush1.msra.mxu0 %v1257
    %1259 = vmatprep.subr.mxu0 0.0
    %v1260 = vand.u32 %v1215, 4294901760
    %1261 = vmatpush1.msra.mxu0 %v1260
    %1262 = vmatprep.subr.mxu0 0.0
    %v1263 = vand.u32 %v1216, 4294901760
    %1264 = vmatpush1.msra.mxu0 %v1263
    %1265 = vmatprep.subr.mxu0 0.0
    %v1266 = vand.u32 %v1217, 4294901760
    %1267 = vmatpush1.msra.mxu0 %v1266
    %1268 = vmatprep.subr.mxu0 0.0
    %v1269 = vand.u32 %v1218, 4294901760
    %1270 = vmatpush1.msra.mxu0 %v1269
    %1271 = vmatprep.subr.mxu0 0.0
    %1272 = vmatpush1.msra.mxu0 0.0
    %1273 = vmatprep.subr.mxu0 0.0
    %1274 = vmatpush1.msra.mxu0 0.0
    %1275 = vmatprep.subr.mxu0 0.0
    %1276 = vmatpush1.msra.mxu0 0.0
    %1277 = vmatprep.subr.mxu0 0.0
    %1278 = vmatpush1.msra.mxu0 0.0
    %1279 = vmatprep.subr.mxu0 0.0
    %1280 = vmatpush1.msra.mxu0 0.0
    %1281 = vmatprep.subr.mxu0 0.0
    %1282 = vmatpush1.msra.mxu0 0.0
    %1283 = vmatprep.subr.mxu0 0.0
    %1284 = vmatpush1.msra.mxu0 0.0
    %1285 = vmatprep.subr.mxu0 0.0
    %1286 = vmatpush1.msra.mxu0 0.0
    %1287 = vmatprep.subr.mxu0 0.0
    %1288 = vmatpush1.msra.mxu0 0.0
    %1289 = vmatprep.subr.mxu0 0.0
    %1290 = vmatpush1.msra.mxu0 0.0
    %1291 = vmatprep.subr.mxu0 0.0
    %1292 = vmatpush1.msra.mxu0 0.0
    %1293 = vmatprep.subr.mxu0 0.0
    %1294 = vmatpush1.msra.mxu0 0.0
    %1295 = vmatprep.subr.mxu0 0.0
    %1296 = vmatpush1.msra.mxu0 0.0
    %1297 = vmatprep.subr.mxu0 0.0
    %1298 = vmatpush1.msra.mxu0 0.0
    %1299 = vmatprep.subr.mxu0 0.0
    %1300 = vmatpush1.msra.mxu0 0.0
    %1301 = vmatprep.subr.mxu0 0.0
    %1302 = vmatpush1.msra.mxu0 0.0
    %1303 = vmatprep.mubr.f32.mxu0 0.0
    %v1304 = vand.u32 %v1202, 4294901760
    %v1305 = vsub.f32 %v1202, %v1304
    %v1306 = vand.u32 %v1305, 4294901760
    %v1307 = vsub.f32 %v1305, %v1306
    %v1308 = vand.u32 %v1307, 4294901760
    %1309 = vmatmul.mubr.f32.gmra.mrb[0].mxu0 %v1308
    %v1310 = vpop.f32.mrb[0].mxu0
    %v1311 = vadd.f32 %v1222, %v1310
    %v1312 = vpop.f32.mrb[0].mxu0
    %1313 = vdwg.mxu0
    %1314 = vmatprep.subr.mxu0 0.0
    %v1315 = vand.u32 %v1203, 4294901760
    %v1316 = vsub.f32 %v1203, %v1315
    %v1317 = vand.u32 %v1316, 4294901760
    %v1318 = vsub.f32 %v1316, %v1317
    %v1319 = vand.u32 %v1318, 4294901760
    %1320 = vmatpush1.msra.mxu0 %v1319
    %1321 = vmatprep.subr.mxu0 0.0
    %v1322 = vand.u32 %v1204, 4294901760
    %v1323 = vsub.f32 %v1204, %v1322
    %v1324 = vand.u32 %v1323, 4294901760
    %v1325 = vsub.f32 %v1323, %v1324
    %v1326 = vand.u32 %v1325, 4294901760
    %1327 = vmatpush1.msra.mxu0 %v1326
    %1328 = vmatprep.subr.mxu0 0.0
    %v1329 = vand.u32 %v1205, 4294901760
    %v1330 = vsub.f32 %v1205, %v1329
    %v1331 = vand.u32 %v1330, 4294901760
    %v1332 = vsub.f32 %v1330, %v1331
    %v1333 = vand.u32 %v1332, 4294901760
    %1334 = vmatpush1.msra.mxu0 %v1333
    %1335 = vmatprep.subr.mxu0 0.0
    %v1336 = vand.u32 %v1206, 4294901760
    %v1337 = vsub.f32 %v1206, %v1336
    %v1338 = vand.u32 %v1337, 4294901760
    %v1339 = vsub.f32 %v1337, %v1338
    %v1340 = vand.u32 %v1339, 4294901760
    %1341 = vmatpush1.msra.mxu0 %v1340
    %1342 = vmatprep.subr.mxu0 0.0
    %v1343 = vand.u32 %v1207, 4294901760
    %v1344 = vsub.f32 %v1207, %v1343
    %v1345 = vand.u32 %v1344, 4294901760
    %v1346 = vsub.f32 %v1344, %v1345
    %v1347 = vand.u32 %v1346, 4294901760
    %1348 = vmatpush1.msra.mxu0 %v1347
    %1349 = vmatprep.subr.mxu0 0.0
    %v1350 = vand.u32 %v1208, 4294901760
    %v1351 = vsub.f32 %v1208, %v1350
    %v1352 = vand.u32 %v1351, 4294901760
    %v1353 = vsub.f32 %v1351, %v1352
    %v1354 = vand.u32 %v1353, 4294901760
    %1355 = vmatpush1.msra.mxu0 %v1354
    %1356 = vmatprep.subr.mxu0 0.0
    %v1357 = vand.u32 %v1209, 4294901760
    %v1358 = vsub.f32 %v1209, %v1357
    %v1359 = vand.u32 %v1358, 4294901760
    %v1360 = vsub.f32 %v1358, %v1359
    %v1361 = vand.u32 %v1360, 4294901760
    %1362 = vmatpush1.msra.mxu0 %v1361
    %1363 = vmatprep.subr.mxu0 0.0
    %v1364 = vand.u32 %v1210, 4294901760
    %v1365 = vsub.f32 %v1210, %v1364
    %v1366 = vand.u32 %v1365, 4294901760
    %v1367 = vsub.f32 %v1365, %v1366
    %v1368 = vand.u32 %v1367, 4294901760
    %1369 = vmatpush1.msra.mxu0 %v1368
    %1370 = vmatprep.subr.mxu0 0.0
    %v1371 = vand.u32 %v1211, 4294901760
    %v1372 = vsub.f32 %v1211, %v1371
    %v1373 = vand.u32 %v1372, 4294901760
    %v1374 = vsub.f32 %v1372, %v1373
    %v1375 = vand.u32 %v1374, 4294901760
    %1376 = vmatpush1.msra.mxu0 %v1375
    %1377 = vmatprep.subr.mxu0 0.0
    %v1378 = vand.u32 %v1212, 4294901760
    %v1379 = vsub.f32 %v1212, %v1378
    %v1380 = vand.u32 %v1379, 4294901760
    %v1381 = vsub.f32 %v1379, %v1380
    %v1382 = vand.u32 %v1381, 4294901760
    %1383 = vmatpush1.msra.mxu0 %v1382
    %1384 = vmatprep.subr.mxu0 0.0
    %v1385 = vand.u32 %v1213, 4294901760
    %v1386 = vsub.f32 %v1213, %v1385
    %v1387 = vand.u32 %v1386, 4294901760
    %v1388 = vsub.f32 %v1386, %v1387
    %v1389 = vand.u32 %v1388, 4294901760
    %1390 = vmatpush1.msra.mxu0 %v1389
    %1391 = vmatprep.subr.mxu0 0.0
    %v1392 = vand.u32 %v1214, 4294901760
    %v1393 = vsub.f32 %v1214, %v1392
    %v1394 = vand.u32 %v1393, 4294901760
    %v1395 = vsub.f32 %v1393, %v1394
    %v1396 = vand.u32 %v1395, 4294901760
    %1397 = vmatpush1.msra.mxu0 %v1396
    %1398 = vmatprep.subr.mxu0 0.0
    %v1399 = vand.u32 %v1215, 4294901760
    %v1400 = vsub.f32 %v1215, %v1399
    %v1401 = vand.u32 %v1400, 4294901760
    %v1402 = vsub.f32 %v1400, %v1401
    %v1403 = vand.u32 %v1402, 4294901760
    %1404 = vmatpush1.msra.mxu0 %v1403
    %1405 = vmatprep.subr.mxu0 0.0
    %v1406 = vand.u32 %v1216, 4294901760
    %v1407 = vsub.f32 %v1216, %v1406
    %v1408 = vand.u32 %v1407, 4294901760
    %v1409 = vsub.f32 %v1407, %v1408
    %v1410 = vand.u32 %v1409, 4294901760
    %1411 = vmatpush1.msra.mxu0 %v1410
    %1412 = vmatprep.subr.mxu0 0.0
    %v1413 = vand.u32 %v1217, 4294901760
    %v1414 = vsub.f32 %v1217, %v1413
    %v1415 = vand.u32 %v1414, 4294901760
    %v1416 = vsub.f32 %v1414, %v1415
    %v1417 = vand.u32 %v1416, 4294901760
    %1418 = vmatpush1.msra.mxu0 %v1417
    %1419 = vmatprep.subr.mxu0 0.0
    %v1420 = vand.u32 %v1218, 4294901760
    %v1421 = vsub.f32 %v1218, %v1420
    %v1422 = vand.u32 %v1421, 4294901760
    %v1423 = vsub.f32 %v1421, %v1422
    %v1424 = vand.u32 %v1423, 4294901760
    %1425 = vmatpush1.msra.mxu0 %v1424
    %1426 = vmatprep.subr.mxu0 0.0
    %1427 = vmatpush1.msra.mxu0 0.0
    %1428 = vmatprep.subr.mxu0 0.0
    %1429 = vmatpush1.msra.mxu0 0.0
    %1430 = vmatprep.subr.mxu0 0.0
    %1431 = vmatpush1.msra.mxu0 0.0
    %1432 = vmatprep.subr.mxu0 0.0
    %1433 = vmatpush1.msra.mxu0 0.0
    %1434 = vmatprep.subr.mxu0 0.0
    %1435 = vmatpush1.msra.mxu0 0.0
    %1436 = vmatprep.subr.mxu0 0.0
    %1437 = vmatpush1.msra.mxu0 0.0
    %1438 = vmatprep.subr.mxu0 0.0
    %1439 = vmatpush1.msra.mxu0 0.0
    %1440 = vmatprep.subr.mxu0 0.0
    %1441 = vmatpush1.msra.mxu0 0.0
    %1442 = vmatprep.subr.mxu0 0.0
    %1443 = vmatpush1.msra.mxu0 0.0
    %1444 = vmatprep.subr.mxu0 0.0
    %1445 = vmatpush1.msra.mxu0 0.0
    %1446 = vmatprep.subr.mxu0 0.0
    %1447 = vmatpush1.msra.mxu0 0.0
    %1448 = vmatprep.subr.mxu0 0.0
    %1449 = vmatpush1.msra.mxu0 0.0
    %1450 = vmatprep.subr.mxu0 0.0
    %1451 = vmatpush1.msra.mxu0 0.0
    %1452 = vmatprep.subr.mxu0 0.0
    %1453 = vmatpush1.msra.mxu0 0.0
    %1454 = vmatprep.subr.mxu0 0.0
    %1455 = vmatpush1.msra.mxu0 0.0
    %1456 = vmatprep.subr.mxu0 0.0
    %1457 = vmatpush1.msra.mxu0 0.0
    %1458 = vmatprep.mubr.f32.mxu0 0.0
    %v1459 = vand.u32 %v1202, 4294901760
    %1460 = vmatmul.mubr.f32.gmra.mrb[0].mxu0 %v1459
    %v1461 = vpop.f32.mrb[0].mxu0
    %v1462 = vadd.f32 %v1311, %v1461
    %v1463 = vpop.f32.mrb[0].mxu0
    %1464 = vdwg.mxu0
    %1465 = vmatprep.subr.mxu0 0.0
    %v1466 = vand.u32 %v1203, 4294901760
    %v1467 = vsub.f32 %v1203, %v1466
    %1468 = vmatpush1.msra.mxu0 %v1467
    %1469 = vmatprep.subr.mxu0 0.0
    %v1470 = vand.u32 %v1204, 4294901760
    %v1471 = vsub.f32 %v1204, %v1470
    %1472 = vmatpush1.msra.mxu0 %v1471
    %1473 = vmatprep.subr.mxu0 0.0
    %v1474 = vand.u32 %v1205, 4294901760
    %v1475 = vsub.f32 %v1205, %v1474
    %1476 = vmatpush1.msra.mxu0 %v1475
    %1477 = vmatprep.subr.mxu0 0.0
    %v1478 = vand.u32 %v1206, 4294901760
    %v1479 = vsub.f32 %v1206, %v1478
    %1480 = vmatpush1.msra.mxu0 %v1479
    %1481 = vmatprep.subr.mxu0 0.0
    %v1482 = vand.u32 %v1207, 4294901760
    %v1483 = vsub.f32 %v1207, %v1482
    %1484 = vmatpush1.msra.mxu0 %v1483
    %1485 = vmatprep.subr.mxu0 0.0
    %v1486 = vand.u32 %v1208, 4294901760
    %v1487 = vsub.f32 %v1208, %v1486
    %1488 = vmatpush1.msra.mxu0 %v1487
    %1489 = vmatprep.subr.mxu0 0.0
    %v1490 = vand.u32 %v1209, 4294901760
    %v1491 = vsub.f32 %v1209, %v1490
    %1492 = vmatpush1.msra.mxu0 %v1491
    %1493 = vmatprep.subr.mxu0 0.0
    %v1494 = vand.u32 %v1210, 4294901760
    %v1495 = vsub.f32 %v1210, %v1494
    %1496 = vmatpush1.msra.mxu0 %v1495
    %1497 = vmatprep.subr.mxu0 0.0
    %v1498 = vand.u32 %v1211, 4294901760
    %v1499 = vsub.f32 %v1211, %v1498
    %1500 = vmatpush1.msra.mxu0 %v1499
    %1501 = vmatprep.subr.mxu0 0.0
    %v1502 = vand.u32 %v1212, 4294901760
    %v1503 = vsub.f32 %v1212, %v1502
    %1504 = vmatpush1.msra.mxu0 %v1503
    %1505 = vmatprep.subr.mxu0 0.0
    %v1506 = vand.u32 %v1213, 4294901760
    %v1507 = vsub.f32 %v1213, %v1506
    %1508 = vmatpush1.msra.mxu0 %v1507
    %1509 = vmatprep.subr.mxu0 0.0
    %v1510 = vand.u32 %v1214, 4294901760
    %v1511 = vsub.f32 %v1214, %v1510
    %1512 = vmatpush1.msra.mxu0 %v1511
    %1513 = vmatprep.subr.mxu0 0.0
    %v1514 = vand.u32 %v1215, 4294901760
    %v1515 = vsub.f32 %v1215, %v1514
    %1516 = vmatpush1.msra.mxu0 %v1515
    %1517 = vmatprep.subr.mxu0 0.0
    %v1518 = vand.u32 %v1216, 4294901760
    %v1519 = vsub.f32 %v1216, %v1518
    %1520 = vmatpush1.msra.mxu0 %v1519
    %1521 = vmatprep.subr.mxu0 0.0
    %v1522 = vand.u32 %v1217, 4294901760
    %v1523 = vsub.f32 %v1217, %v1522
    %1524 = vmatpush1.msra.mxu0 %v1523
    %1525 = vmatprep.subr.mxu0 0.0
    %v1526 = vand.u32 %v1218, 4294901760
    %v1527 = vsub.f32 %v1218, %v1526
    %1528 = vmatpush1.msra.mxu0 %v1527
    %1529 = vmatprep.subr.mxu0 0.0
    %1530 = vmatpush1.msra.mxu0 0.0
    %1531 = vmatprep.subr.mxu0 0.0
    %1532 = vmatpush1.msra.mxu0 0.0
    %1533 = vmatprep.subr.mxu0 0.0
    %1534 = vmatpush1.msra.mxu0 0.0
    %1535 = vmatprep.subr.mxu0 0.0
    %1536 = vmatpush1.msra.mxu0 0.0
    %1537 = vmatprep.subr.mxu0 0.0
    %1538 = vmatpush1.msra.mxu0 0.0
    %1539 = vmatprep.subr.mxu0 0.0
    %1540 = vmatpush1.msra.mxu0 0.0
    %1541 = vmatprep.subr.mxu0 0.0
    %1542 = vmatpush1.msra.mxu0 0.0
    %1543 = vmatprep.subr.mxu0 0.0
    %1544 = vmatpush1.msra.mxu0 0.0
    %1545 = vmatprep.subr.mxu0 0.0
    %1546 = vmatpush1.msra.mxu0 0.0
    %1547 = vmatprep.subr.mxu0 0.0
    %1548 = vmatpush1.msra.mxu0 0.0
    %1549 = vmatprep.subr.mxu0 0.0
    %1550 = vmatpush1.msra.mxu0 0.0
    %1551 = vmatprep.subr.mxu0 0.0
    %1552 = vmatpush1.msra.mxu0 0.0
    %1553 = vmatprep.subr.mxu0 0.0
    %1554 = vmatpush1.msra.mxu0 0.0
    %1555 = vmatprep.subr.mxu0 0.0
    %1556 = vmatpush1.msra.mxu0 0.0
    %1557 = vmatprep.subr.mxu0 0.0
    %1558 = vmatpush1.msra.mxu0 0.0
    %1559 = vmatprep.subr.mxu0 0.0
    %1560 = vmatpush1.msra.mxu0 0.0
    %1561 = vmatprep.mubr.f32.mxu0 0.0
    %v1562 = vand.u32 %v1202, 4294901760
    %v1563 = vsub.f32 %v1202, %v1562
    %1564 = vmatmul.mubr.f32.gmra.mrb[0].mxu0 %v1563
    %v1565 = vpop.f32.mrb[0].mxu0
    %v1566 = vadd.f32 %v1462, %v1565
    %v1567 = vpop.f32.mrb[0].mxu0
    %1568 = vdwg.mxu0
    %1569 = vmatprep.subr.mxu0 0.0
    %v1570 = vand.u32 %v1203, 4294901760
    %1571 = vmatpush1.msra.mxu0 %v1570
    %1572 = vmatprep.subr.mxu0 0.0
    %v1573 = vand.u32 %v1204, 4294901760
    %1574 = vmatpush1.msra.mxu0 %v1573
    %1575 = vmatprep.subr.mxu0 0.0
    %v1576 = vand.u32 %v1205, 4294901760
    %1577 = vmatpush1.msra.mxu0 %v1576
    %1578 = vmatprep.subr.mxu0 0.0
    %v1579 = vand.u32 %v1206, 4294901760
    %1580 = vmatpush1.msra.mxu0 %v1579
    %1581 = vmatprep.subr.mxu0 0.0
    %v1582 = vand.u32 %v1207, 4294901760
    %1583 = vmatpush1.msra.mxu0 %v1582
    %1584 = vmatprep.subr.mxu0 0.0
    %v1585 = vand.u32 %v1208, 4294901760
    %1586 = vmatpush1.msra.mxu0 %v1585
    %1587 = vmatprep.subr.mxu0 0.0
    %v1588 = vand.u32 %v1209, 4294901760
    %1589 = vmatpush1.msra.mxu0 %v1588
    %1590 = vmatprep.subr.mxu0 0.0
    %v1591 = vand.u32 %v1210, 4294901760
    %1592 = vmatpush1.msra.mxu0 %v1591
    %1593 = vmatprep.subr.mxu0 0.0
    %v1594 = vand.u32 %v1211, 4294901760
    %1595 = vmatpush1.msra.mxu0 %v1594
    %1596 = vmatprep.subr.mxu0 0.0
    %v1597 = vand.u32 %v1212, 4294901760
    %1598 = vmatpush1.msra.mxu0 %v1597
    %1599 = vmatprep.subr.mxu0 0.0
    %v1600 = vand.u32 %v1213, 4294901760
    %1601 = vmatpush1.msra.mxu0 %v1600
    %1602 = vmatprep.subr.mxu0 0.0
    %v1603 = vand.u32 %v1214, 4294901760
    %1604 = vmatpush1.msra.mxu0 %v1603
    %1605 = vmatprep.subr.mxu0 0.0
    %v1606 = vand.u32 %v1215, 4294901760
    %1607 = vmatpush1.msra.mxu0 %v1606
    %1608 = vmatprep.subr.mxu0 0.0
    %v1609 = vand.u32 %v1216, 4294901760
    %1610 = vmatpush1.msra.mxu0 %v1609
    %1611 = vmatprep.subr.mxu0 0.0
    %v1612 = vand.u32 %v1217, 4294901760
    %1613 = vmatpush1.msra.mxu0 %v1612
    %1614 = vmatprep.subr.mxu0 0.0
    %v1615 = vand.u32 %v1218, 4294901760
    %1616 = vmatpush1.msra.mxu0 %v1615
    %1617 = vmatprep.subr.mxu0 0.0
    %1618 = vmatpush1.msra.mxu0 0.0
    %1619 = vmatprep.subr.mxu0 0.0
    %1620 = vmatpush1.msra.mxu0 0.0
    %1621 = vmatprep.subr.mxu0 0.0
    %1622 = vmatpush1.msra.mxu0 0.0
    %1623 = vmatprep.subr.mxu0 0.0
    %1624 = vmatpush1.msra.mxu0 0.0
    %1625 = vmatprep.subr.mxu0 0.0
    %1626 = vmatpush1.msra.mxu0 0.0
    %1627 = vmatprep.subr.mxu0 0.0
    %1628 = vmatpush1.msra.mxu0 0.0
    %1629 = vmatprep.subr.mxu0 0.0
    %1630 = vmatpush1.msra.mxu0 0.0
    %1631 = vmatprep.subr.mxu0 0.0
    %1632 = vmatpush1.msra.mxu0 0.0
    %1633 = vmatprep.subr.mxu0 0.0
    %1634 = vmatpush1.msra.mxu0 0.0
    %1635 = vmatprep.subr.mxu0 0.0
    %1636 = vmatpush1.msra.mxu0 0.0
    %1637 = vmatprep.subr.mxu0 0.0
    %1638 = vmatpush1.msra.mxu0 0.0
    %1639 = vmatprep.subr.mxu0 0.0
    %1640 = vmatpush1.msra.mxu0 0.0
    %1641 = vmatprep.subr.mxu0 0.0
    %1642 = vmatpush1.msra.mxu0 0.0
    %1643 = vmatprep.subr.mxu0 0.0
    %1644 = vmatpush1.msra.mxu0 0.0
    %1645 = vmatprep.subr.mxu0 0.0
    %1646 = vmatpush1.msra.mxu0 0.0
    %1647 = vmatprep.subr.mxu0 0.0
    %1648 = vmatpush1.msra.mxu0 0.0
    %1649 = vmatprep.mubr.f32.mxu0 0.0
    %v1650 = vand.u32 %v1202, 4294901760
    %v1651 = vsub.f32 %v1202, %v1650
    %v1652 = vand.u32 %v1651, 4294901760
    %1653 = vmatmul.mubr.f32.gmra.mrb[0].mxu0 %v1652
    %v1654 = vpop.f32.mrb[0].mxu0
    %v1655 = vadd.f32 %v1566, %v1654
    %v1656 = vpop.f32.mrb[0].mxu0
    %1657 = vdwg.mxu0
    %1658 = vmatprep.subr.mxu0 0.0
    %v1659 = vand.u32 %v1203, 4294901760
    %v1660 = vsub.f32 %v1203, %v1659
    %v1661 = vand.u32 %v1660, 4294901760
    %1662 = vmatpush1.msra.mxu0 %v1661
    %1663 = vmatprep.subr.mxu0 0.0
    %v1664 = vand.u32 %v1204, 4294901760
    %v1665 = vsub.f32 %v1204, %v1664
    %v1666 = vand.u32 %v1665, 4294901760
    %1667 = vmatpush1.msra.mxu0 %v1666
    %1668 = vmatprep.subr.mxu0 0.0
    %v1669 = vand.u32 %v1205, 4294901760
    %v1670 = vsub.f32 %v1205, %v1669
    %v1671 = vand.u32 %v1670, 4294901760
    %1672 = vmatpush1.msra.mxu0 %v1671
    %1673 = vmatprep.subr.mxu0 0.0
    %v1674 = vand.u32 %v1206, 4294901760
    %v1675 = vsub.f32 %v1206, %v1674
    %v1676 = vand.u32 %v1675, 4294901760
    %1677 = vmatpush1.msra.mxu0 %v1676
    %1678 = vmatprep.subr.mxu0 0.0
    %v1679 = vand.u32 %v1207, 4294901760
    %v1680 = vsub.f32 %v1207, %v1679
    %v1681 = vand.u32 %v1680, 4294901760
    %1682 = vmatpush1.msra.mxu0 %v1681
    %1683 = vmatprep.subr.mxu0 0.0
    %v1684 = vand.u32 %v1208, 4294901760
    %v1685 = vsub.f32 %v1208, %v1684
    %v1686 = vand.u32 %v1685, 4294901760
    %1687 = vmatpush1.msra.mxu0 %v1686
    %1688 = vmatprep.subr.mxu0 0.0
    %v1689 = vand.u32 %v1209, 4294901760
    %v1690 = vsub.f32 %v1209, %v1689
    %v1691 = vand.u32 %v1690, 4294901760
    %1692 = vmatpush1.msra.mxu0 %v1691
    %1693 = vmatprep.subr.mxu0 0.0
    %v1694 = vand.u32 %v1210, 4294901760
    %v1695 = vsub.f32 %v1210, %v1694
    %v1696 = vand.u32 %v1695, 4294901760
    %1697 = vmatpush1.msra.mxu0 %v1696
    %1698 = vmatprep.subr.mxu0 0.0
    %v1699 = vand.u32 %v1211, 4294901760
    %v1700 = vsub.f32 %v1211, %v1699
    %v1701 = vand.u32 %v1700, 4294901760
    %1702 = vmatpush1.msra.mxu0 %v1701
    %1703 = vmatprep.subr.mxu0 0.0
    %v1704 = vand.u32 %v1212, 4294901760
    %v1705 = vsub.f32 %v1212, %v1704
    %v1706 = vand.u32 %v1705, 4294901760
    %1707 = vmatpush1.msra.mxu0 %v1706
    %1708 = vmatprep.subr.mxu0 0.0
    %v1709 = vand.u32 %v1213, 4294901760
    %v1710 = vsub.f32 %v1213, %v1709
    %v1711 = vand.u32 %v1710, 4294901760
    %1712 = vmatpush1.msra.mxu0 %v1711
    %1713 = vmatprep.subr.mxu0 0.0
    %v1714 = vand.u32 %v1214, 4294901760
    %v1715 = vsub.f32 %v1214, %v1714
    %v1716 = vand.u32 %v1715, 4294901760
    %1717 = vmatpush1.msra.mxu0 %v1716
    %1718 = vmatprep.subr.mxu0 0.0
    %v1719 = vand.u32 %v1215, 4294901760
    %v1720 = vsub.f32 %v1215, %v1719
    %v1721 = vand.u32 %v1720, 4294901760
    %1722 = vmatpush1.msra.mxu0 %v1721
    %1723 = vmatprep.subr.mxu0 0.0
    %v1724 = vand.u32 %v1216, 4294901760
    %v1725 = vsub.f32 %v1216, %v1724
    %v1726 = vand.u32 %v1725, 4294901760
    %1727 = vmatpush1.msra.mxu0 %v1726
    %1728 = vmatprep.subr.mxu0 0.0
    %v1729 = vand.u32 %v1217, 4294901760
    %v1730 = vsub.f32 %v1217, %v1729
    %v1731 = vand.u32 %v1730, 4294901760
    %1732 = vmatpush1.msra.mxu0 %v1731
    %1733 = vmatprep.subr.mxu0 0.0
    %v1734 = vand.u32 %v1218, 4294901760
    %v1735 = vsub.f32 %v1218, %v1734
    %v1736 = vand.u32 %v1735, 4294901760
    %1737 = vmatpush1.msra.mxu0 %v1736
    %1738 = vmatprep.subr.mxu0 0.0
    %1739 = vmatpush1.msra.mxu0 0.0
    %1740 = vmatprep.subr.mxu0 0.0
    %1741 = vmatpush1.msra.mxu0 0.0
    %1742 = vmatprep.subr.mxu0 0.0
    %1743 = vmatpush1.msra.mxu0 0.0
    %1744 = vmatprep.subr.mxu0 0.0
    %1745 = vmatpush1.msra.mxu0 0.0
    %1746 = vmatprep.subr.mxu0 0.0
    %1747 = vmatpush1.msra.mxu0 0.0
    %1748 = vmatprep.subr.mxu0 0.0
    %1749 = vmatpush1.msra.mxu0 0.0
    %1750 = vmatprep.subr.mxu0 0.0
    %1751 = vmatpush1.msra.mxu0 0.0
    %1752 = vmatprep.subr.mxu0 0.0
    %1753 = vmatpush1.msra.mxu0 0.0
    %1754 = vmatprep.subr.mxu0 0.0
    %1755 = vmatpush1.msra.mxu0 0.0
    %1756 = vmatprep.subr.mxu0 0.0
    %1757 = vmatpush1.msra.mxu0 0.0
    %1758 = vmatprep.subr.mxu0 0.0
    %1759 = vmatpush1.msra.mxu0 0.0
    %1760 = vmatprep.subr.mxu0 0.0
    %1761 = vmatpush1.msra.mxu0 0.0
    %1762 = vmatprep.subr.mxu0 0.0
    %1763 = vmatpush1.msra.mxu0 0.0
    %1764 = vmatprep.subr.mxu0 0.0
    %1765 = vmatpush1.msra.mxu0 0.0
    %1766 = vmatprep.subr.mxu0 0.0
    %1767 = vmatpush1.msra.mxu0 0.0
    %1768 = vmatprep.subr.mxu0 0.0
    %1769 = vmatpush1.msra.mxu0 0.0
    %1770 = vmatprep.mubr.f32.mxu0 0.0
    %v1771 = vand.u32 %v1202, 4294901760
    %1772 = vmatmul.mubr.f32.gmra.mrb[0].mxu0 %v1771
    %v1773 = vpop.f32.mrb[0].mxu0
    %v1774 = vadd.f32 %v1655, %v1773
    %v1775 = vpop.f32.mrb[0].mxu0
    %1776 = vdwg.mxu0
    %1777 = vmatprep.subr.mxu0 0.0
    %v1778 = vand.u32 %v1203, 4294901760
    %1779 = vmatpush1.msra.mxu0 %v1778
    %1780 = vmatprep.subr.mxu0 0.0
    %v1781 = vand.u32 %v1204, 4294901760
    %1782 = vmatpush1.msra.mxu0 %v1781
    %1783 = vmatprep.subr.mxu0 0.0
    %v1784 = vand.u32 %v1205, 4294901760
    %1785 = vmatpush1.msra.mxu0 %v1784
    %1786 = vmatprep.subr.mxu0 0.0
    %v1787 = vand.u32 %v1206, 4294901760
    %1788 = vmatpush1.msra.mxu0 %v1787
    %1789 = vmatprep.subr.mxu0 0.0
    %v1790 = vand.u32 %v1207, 4294901760
    %1791 = vmatpush1.msra.mxu0 %v1790
    %1792 = vmatprep.subr.mxu0 0.0
    %v1793 = vand.u32 %v1208, 4294901760
    %1794 = vmatpush1.msra.mxu0 %v1793
    %1795 = vmatprep.subr.mxu0 0.0
    %v1796 = vand.u32 %v1209, 4294901760
    %1797 = vmatpush1.msra.mxu0 %v1796
    %1798 = vmatprep.subr.mxu0 0.0
    %v1799 = vand.u32 %v1210, 4294901760
    %1800 = vmatpush1.msra.mxu0 %v1799
    %1801 = vmatprep.subr.mxu0 0.0
    %v1802 = vand.u32 %v1211, 4294901760
    %1803 = vmatpush1.msra.mxu0 %v1802
    %1804 = vmatprep.subr.mxu0 0.0
    %v1805 = vand.u32 %v1212, 4294901760
    %1806 = vmatpush1.msra.mxu0 %v1805
    %1807 = vmatprep.subr.mxu0 0.0
    %v1808 = vand.u32 %v1213, 4294901760
    %1809 = vmatpush1.msra.mxu0 %v1808
    %1810 = vmatprep.subr.mxu0 0.0
    %v1811 = vand.u32 %v1214, 4294901760
    %1812 = vmatpush1.msra.mxu0 %v1811
    %1813 = vmatprep.subr.mxu0 0.0
    %v1814 = vand.u32 %v1215, 4294901760
    %1815 = vmatpush1.msra.mxu0 %v1814
    %1816 = vmatprep.subr.mxu0 0.0
    %v1817 = vand.u32 %v1216, 4294901760
    %1818 = vmatpush1.msra.mxu0 %v1817
    %1819 = vmatprep.subr.mxu0 0.0
    %v1820 = vand.u32 %v1217, 4294901760
    %1821 = vmatpush1.msra.mxu0 %v1820
    %1822 = vmatprep.subr.mxu0 0.0
    %v1823 = vand.u32 %v1218, 4294901760
    %1824 = vmatpush1.msra.mxu0 %v1823
    %1825 = vmatprep.subr.mxu0 0.0
    %1826 = vmatpush1.msra.mxu0 0.0
    %1827 = vmatprep.subr.mxu0 0.0
    %1828 = vmatpush1.msra.mxu0 0.0
    %1829 = vmatprep.subr.mxu0 0.0
    %1830 = vmatpush1.msra.mxu0 0.0
    %1831 = vmatprep.subr.mxu0 0.0
    %1832 = vmatpush1.msra.mxu0 0.0
    %1833 = vmatprep.subr.mxu0 0.0
    %1834 = vmatpush1.msra.mxu0 0.0
    %1835 = vmatprep.subr.mxu0 0.0
    %1836 = vmatpush1.msra.mxu0 0.0
    %1837 = vmatprep.subr.mxu0 0.0
    %1838 = vmatpush1.msra.mxu0 0.0
    %1839 = vmatprep.subr.mxu0 0.0
    %1840 = vmatpush1.msra.mxu0 0.0
    %1841 = vmatprep.subr.mxu0 0.0
    %1842 = vmatpush1.msra.mxu0 0.0
    %1843 = vmatprep.subr.mxu0 0.0
    %1844 = vmatpush1.msra.mxu0 0.0
    %1845 = vmatprep.subr.mxu0 0.0
    %1846 = vmatpush1.msra.mxu0 0.0
    %1847 = vmatprep.subr.mxu0 0.0
    %1848 = vmatpush1.msra.mxu0 0.0
    %1849 = vmatprep.subr.mxu0 0.0
    %1850 = vmatpush1.msra.mxu0 0.0
    %1851 = vmatprep.subr.mxu0 0.0
    %1852 = vmatpush1.msra.mxu0 0.0
    %1853 = vmatprep.subr.mxu0 0.0
    %1854 = vmatpush1.msra.mxu0 0.0
    %1855 = vmatprep.subr.mxu0 0.0
    %1856 = vmatpush1.msra.mxu0 0.0
    %1857 = vmatprep.mubr.f32.mxu0 0.0
    %v1858 = vand.u32 %v1202, 4294901760
    %1859 = vmatmul.mubr.f32.gmra.mrb[0].mxu0 %v1858
    %v1860 = vpop.f32.mrb[0].mxu0
    %v1861 = vadd.f32 %v1774, %v1860
    %v1862 = vpop.f32.mrb[0].mxu0
    %1863 = vdwg.mxu0
    %1864 = vst [vmem:[#allocation7] sm:$0xff] %v1861
    // Predicated region
    $region22: #{tpu_custom_call.1} parent=1 // pred_check
      _
    $region23: #{tpu_custom_call.1} parent=1 // pred_check_branch
      %1866 = sbr.rel (0) target = $region25
    $region24: #{tpu_custom_call.1} parent=1 // pred_region
      %s1868 = ssub.s32 128, 128
      %1869 = vsyncadd [#allocation4], %s1868
      %s1871 = sshll.u32 [#allocation7], 4
      %s1872 = int_to_ptr.vmem [resolvable:$true] %s1871
      %1874 = dma.vmem_to_hbm [thread:$0]  %s1872, 128, %s3, [#allocation4]
    $region25: #{tpu_custom_call.1} parent=1 // pred_fallthru
      _
    // Predicated region
    $region26: #{tpu_custom_call.1} parent=1 // pred_check
      _
    $region27: #{tpu_custom_call.1} parent=1 // pred_check_branch
      %1876 = sbr.rel (0) target = $region29
    $region28: #{tpu_custom_call.1} parent=1 // pred_region
      %1877 = dma.done [#allocation4], 128
    $region29: #{tpu_custom_call.1} parent=1 // pred_fallthru
      _
    %1878 = vsyncpa [#allocation3], 1
    %1879 = vsyncpa [#allocation6], 1
    %1880 = vsyncpa [#allocation4], 1

</llo_original>
